<compile_context>
chip_gen: v7x
topology: tpu7x:2x2x1
jax: 0.10.0
libtpu: 0.0.40
codegen_flags: <defaults>
</compile_context>

<pallas_src>
import jax
import jax.numpy as jnp
from jax.experimental import pallas as pl
from jax.experimental.pallas import tpu as pltpu

HIDDEN = 256
KEY_SIZE = 256
VALUE_SIZE = 256
FEAT_DIM = 40          # raw feature dim; 2*FEAT_DIM == embed_size == 80
DROPOUTS = [0.3, 0.1, 0.2]
T_CHUNK = 32           # timesteps per grid step of the recurrent kernel


def _round_up(n, m):
    return ((n + m - 1) // m) * m


# ----------------------------------------------------------------------------
# Generic tiled linear (used for the fused key_fc/value_fc)
# ----------------------------------------------------------------------------
def _linear_kernel(x_ref, w_ref, b_ref, o_ref):
    o_ref[...] = (jnp.dot(x_ref[...], w_ref[...],
                          preferred_element_type=jnp.float32)
                  + b_ref[...]).astype(o_ref.dtype)


def linear(x2d, w_t, b, out_dtype=jnp.float32, tn=256):
    """x2d: (N, Din) bf16, w_t: (Din, Dout) bf16, b: (Dout,) f32 -> (N, Dout)."""
    N, Din = x2d.shape
    Dout = w_t.shape[1]
    n_pad = _round_up(N, tn)
    if n_pad != N:  # pad rows to a full 256-row MXU tile; zero rows are harmless
        x2d = jnp.concatenate(
            [x2d, jnp.zeros((n_pad - N, Din), x2d.dtype)], axis=0)
    out = pl.pallas_call(
        _linear_kernel,
        out_shape=jax.ShapeDtypeStruct((n_pad, Dout), out_dtype),
        grid_spec=pltpu.PrefetchScalarGridSpec(
            num_scalar_prefetch=0,
            grid=(n_pad // tn,),
            in_specs=[
                pl.BlockSpec((tn, Din), lambda i: (i, 0)),
                pl.BlockSpec((Din, Dout), lambda i: (0, 0),
                             pipeline_mode=pl.Buffered(1)),
                pl.BlockSpec((1, Dout), lambda i: (0, 0),
                             pipeline_mode=pl.Buffered(1)),
            ],
            out_specs=pl.BlockSpec((tn, Dout), lambda i: (i, 0)),
        ),
        compiler_params=pltpu.CompilerParams(
            dimension_semantics=("parallel",)),
    )(x2d, w_t, b.reshape(1, Dout))
    return out[:N]


# ----------------------------------------------------------------------------
# Pyramid reshape fused into the hoisted input projection (both directions)
# ----------------------------------------------------------------------------
def _pyramid_gx_kernel(xe_ref, xo_ref, wt_ref, wb_ref, o_ref):
    acc = jnp.dot(xe_ref[...], wt_ref[...], preferred_element_type=jnp.float32)
    acc = acc + jnp.dot(xo_ref[...], wb_ref[...],
                        preferred_element_type=jnp.float32)
    o_ref[...] = acc.astype(o_ref.dtype)


def pyramid_gx(x, w_top, w_bot, t_chunk):
    """gx[t', b] = concat(x[2t', b], x[2t'+1, b]) @ Wih_cat   (bias added later).

    x: (T, BP, D) time-major.  Returns (t_pad, BP, 8H) bf16 with
    t_pad = ceil((T//2)/t_chunk)*t_chunk, plus (t_half, n_chunks).
    """
    T, BP, D = x.shape
    t_half = T // 2
    n_chunks = max(1, pl.cdiv(t_half, t_chunk))
    t_pad = n_chunks * t_chunk
    x = x[:2 * t_half].astype(jnp.bfloat16)          # truncate odd last frame
    if t_pad != t_half:
        x = jnp.concatenate(
            [x, jnp.zeros((2 * (t_pad - t_half), BP, D), jnp.bfloat16)], axis=0)
    xp = x.reshape(t_pad, 2, BP, D)
    # Even/odd frame split (cheap strided slice); the wide concat intermediate
    # and the two full transposes of the reference pyramid step never exist.
    x_even = xp[:, 0].reshape(t_pad * BP, D)
    x_odd = xp[:, 1].reshape(t_pad * BP, D)

    Gout = w_top.shape[1]                             # 8H (fwd|bwd gates)
    rows = t_chunk * BP
    gx = pl.pallas_call(
        _pyramid_gx_kernel,
        out_shape=jax.ShapeDtypeStruct((t_pad * BP, Gout), jnp.bfloat16),
        grid_spec=pltpu.PrefetchScalarGridSpec(
            num_scalar_prefetch=0,
            grid=(n_chunks,),
            in_specs=[
                pl.BlockSpec((rows, D), lambda i: (i, 0)),
                pl.BlockSpec((rows, D), lambda i: (i, 0)),
                pl.BlockSpec((D, Gout), lambda i: (0, 0),
                             pipeline_mode=pl.Buffered(1)),
                pl.BlockSpec((D, Gout), lambda i: (0, 0),
                             pipeline_mode=pl.Buffered(1)),
            ],
            out_specs=pl.BlockSpec((rows, Gout), lambda i: (i, 0)),
        ),
        compiler_params=pltpu.CompilerParams(
            dimension_semantics=("parallel",)),
    )(x_even, x_odd, w_top, w_bot)
    return gx.reshape(t_pad, BP, Gout), t_half, n_chunks


# ----------------------------------------------------------------------------
# Chunked, length-masked bidirectional LSTM recurrence
# ----------------------------------------------------------------------------
def _bilstm_kernel(gx_ref, whh_ref, bias_ref, lens_ref, out_ref, h_sc, c_sc):
    """grid = (2, n_chunks): axis 0 = direction (parallel), axis 1 = time chunk
    (arbitrary; h/c carried in VMEM scratch).  gx holds x @ Wih (no bias, bf16);
    per step only the small h @ Whh matmul + f32 gate math run."""
    d = pl.program_id(0)               # 0 = forward, 1 = backward
    c = pl.program_id(1)
    n_chunks = pl.num_programs(1)

    @pl.when(c == 0)
    def _():
        h_sc[...] = jnp.zeros_like(h_sc)
        c_sc[...] = jnp.zeros_like(c_sc)

    TT = gx_ref.shape[0]
    H = h_sc.shape[1]
    whh = whh_ref[0]                   # (H, 4H) bf16, resident
    bias = bias_ref[0]                 # (1, 4H) f32, resident
    lens = lens_ref[...]               # (BP, 1) i32
    chunk = (1 - d) * c + d * (n_chunks - 1 - c)

    def step(s, carry):
        idx = (1 - d) * s + d * (TT - 1 - s)          # in-chunk time index
        t_global = chunk * TT + idx
        g = (gx_ref[idx] + bias
             + jnp.dot(h_sc[...].astype(jnp.bfloat16), whh,
                       preferred_element_type=jnp.float32))
        # sigmoid(x) = 0.5*(tanh(0.5x)+1): one EUP op instead of exp+recip
        i_g = 0.5 * (jnp.tanh(0.5 * g[:, 0:H]) + 1.0)
        f_g = 0.5 * (jnp.tanh(0.5 * g[:, H:2 * H]) + 1.0)
        g_g = jnp.tanh(g[:, 2 * H:3 * H])
        o_g = 0.5 * (jnp.tanh(0.5 * g[:, 3 * H:4 * H]) + 1.0)
        c_new = f_g * c_sc[...] + i_g * g_g
        h_new = o_g * jnp.tanh(c_new)
        valid = t_global < lens                       # (BP, 1) bool
        # pack_padded semantics: padded steps freeze the state and emit zeros
        h_sc[...] = jnp.where(valid, h_new, h_sc[...])
        c_sc[...] = jnp.where(valid, c_new, c_sc[...])
        out_ref[idx] = jnp.where(valid, h_new, 0.0).astype(out_ref.dtype)
        return carry

    jax.lax.fori_loop(0, TT, step, 0, unroll=8)


def bilstm_layer(x, lens_arr, layer_params):
    """x: (T, BP, D) pre-pyramid input; lens_arr: (BP,1) i32 = post-pyramid lens.
    Returns (T//2, BP, 2H) bf16."""
    w_top, w_bot, whh_cat, bias_cat = layer_params
    T, BP, _ = x.shape
    H = HIDDEN
    t_half = T // 2
    t_chunk = T_CHUNK if t_half >= T_CHUNK else _round_up(max(t_half, 1), 8)

    # (1) Pyramid concat + x@Wih for BOTH directions, one fused MXU kernel.
    gx, t_half, n_chunks = pyramid_gx(x, w_top, w_bot, t_chunk)
    t_pad = n_chunks * t_chunk

    def io_index(d, c):
        chunk = (1 - d) * c + d * (n_chunks - 1 - c)
        return (chunk, 0, d)

    # (2) Chunked, masked bidirectional recurrence (bf16 output).
    # TODO(synk): lens could move to SMEM via scalar prefetch; kept as a tiny
    # resident VMEM tile (minor).
    out = pl.pallas_call(
        _bilstm_kernel,
        out_shape=jax.ShapeDtypeStruct((t_pad, BP, 2 * H), jnp.bfloat16),
        grid_spec=pltpu.PrefetchScalarGridSpec(
            num_scalar_prefetch=0,
            grid=(2, n_chunks),
            in_specs=[
                pl.BlockSpec((t_chunk, BP, 4 * H), io_index),
                pl.BlockSpec((1, H, 4 * H), lambda d, c: (d, 0, 0),
                             pipeline_mode=pl.Buffered(1)),
                pl.BlockSpec((1, 1, 4 * H), lambda d, c: (d, 0, 0),
                             pipeline_mode=pl.Buffered(1)),
                pl.BlockSpec((BP, 1), lambda d, c: (0, 0),
                             pipeline_mode=pl.Buffered(1)),
            ],
            out_specs=pl.BlockSpec((t_chunk, BP, H), io_index),
            scratch_shapes=[pltpu.VMEM((BP, H), jnp.float32),
                            pltpu.VMEM((BP, H), jnp.float32)],
        ),
        compiler_params=pltpu.CompilerParams(
            dimension_semantics=("parallel", "arbitrary")),
    )(gx, whh_cat, bias_cat, lens_arr)
    return out[:t_half]


# ----------------------------------------------------------------------------
# JAX glue (dropout, mask, parameter init)
# ----------------------------------------------------------------------------
def locked_dropout(x, p, key, training):
    """LockedDropout: one Bernoulli mask over (1, B, D), shared across time."""
    if (not training) or p == 0.0 or key is None:
        return x
    keep = 1.0 - p
    m = jax.random.bernoulli(key, keep, (1, x.shape[1], x.shape[2]))
    return x * m.astype(x.dtype) / keep


def make_mask(lens):
    max_len = max(lens)
    lens_arr = jnp.asarray(lens, jnp.int32)
    idx = jnp.arange(max_len)
    return (idx[None, :] < lens_arr[:, None]).astype(jnp.float32)


def init_lstm_layer(key, input_size, hidden):
    k = 1.0 / float(hidden) ** 0.5
    ks = jax.random.split(key, 8)

    def one_dir(k0, k1, k2, k3):
        wih_t = jax.random.uniform(k0, (input_size, 4 * hidden), minval=-k, maxval=k)
        whh_t = jax.random.uniform(k1, (hidden, 4 * hidden), minval=-k, maxval=k)
        b_ih = jax.random.uniform(k2, (4 * hidden,), minval=-k, maxval=k)
        b_hh = jax.random.uniform(k3, (4 * hidden,), minval=-k, maxval=k)
        return wih_t, whh_t, b_ih + b_hh

    wf, hf, bf = one_dir(*ks[:4])
    wb_, hb, bb = one_dir(*ks[4:])
    wih_cat = jnp.concatenate([wf, wb_], axis=1)            # (2D, 8H)
    half = input_size // 2
    w_top = wih_cat[:half].astype(jnp.bfloat16)              # even frame weights
    w_bot = wih_cat[half:].astype(jnp.bfloat16)              # odd frame weights
    whh_cat = jnp.stack([hf, hb], axis=0).astype(jnp.bfloat16)   # (2, H, 4H)
    bias_cat = jnp.stack([bf, bb], axis=0).reshape(
        2, 1, 4 * hidden).astype(jnp.float32)                # (2, 1, 4H)
    return w_top, w_bot, whh_cat, bias_cat


def init_params(key):
    params = {}
    in_sizes = [2 * FEAT_DIM, 4 * HIDDEN, 4 * HIDDEN]        # 80, 1024, 1024
    keys = jax.random.split(key, 4)
    for layer in range(3):
        params[f"rnn{layer + 1}"] = init_lstm_layer(keys[layer],
                                                    in_sizes[layer], HIDDEN)
    kf = 1.0 / float(2 * HIDDEN) ** 0.5
    kk1, kk2, kv1, kv2 = jax.random.split(keys[3], 4)
    kw = jax.random.uniform(kk1, (2 * HIDDEN, KEY_SIZE), minval=-kf, maxval=kf)
    kb = jax.random.uniform(kk2, (KEY_SIZE,), minval=-kf, maxval=kf)
    vw = jax.random.uniform(kv1, (2 * HIDDEN, VALUE_SIZE), minval=-kf, maxval=kf)
    vb = jax.random.uniform(kv2, (VALUE_SIZE,), minval=-kf, maxval=kf)
    # key_fc and value_fc fused into a single (2H, 512) linear
    params["kv_fc"] = (jnp.concatenate([kw, vw], axis=1).astype(jnp.bfloat16),
                       jnp.concatenate([kb, vb], axis=0).astype(jnp.float32))
    return params


# ----------------------------------------------------------------------------
# Listener forward
# ----------------------------------------------------------------------------
def listener_forward(seq_batch, params, training=True, dropout_key=None):
    # seq_batch: list of (T_i, FEAT_DIM) arrays
    lens = [int(s.shape[0]) for s in seq_batch]
    B = len(seq_batch)
    T = max(lens)
    D = seq_batch[0].shape[1]
    b_pad = max(8, _round_up(B, 8))        # pad batch to a full sublane multiple

    # rnn.pad_sequence; padded batch columns have length 0 -> masked everywhere.
    padded = jnp.zeros((T, b_pad, D), jnp.float32)
    for b, s in enumerate(seq_batch):
        padded = padded.at[:s.shape[0], b, :].set(s.astype(jnp.float32))

    dkeys = (list(jax.random.split(dropout_key, 3)) if dropout_key is not None
             else [None] * 3)

    cur, cur_lens = padded, lens
    for layer in range(3):
        cur_lens = [l // 2 for l in cur_lens]          # pyramid halving
        lens_arr = jnp.zeros((b_pad, 1), jnp.int32).at[:B, 0].set(
            jnp.asarray(cur_lens, jnp.int32))
        out = bilstm_layer(cur, lens_arr, params[f"rnn{layer + 1}"])
        cur = locked_dropout(out, DROPOUTS[layer], dkeys[layer], training)

    T3 = cur.shape[0]
    kv_w, kv_b = params["kv_fc"]
    flat = cur.reshape(T3 * b_pad, 2 * HIDDEN).astype(jnp.bfloat16)
    kv = linear(flat, kv_w, kv_b).reshape(T3, b_pad, KEY_SIZE + VALUE_SIZE)
    key_out = kv[:, :B, :KEY_SIZE]
    val_out = kv[:, :B, KEY_SIZE:]
    out_mask = make_mask(cur_lens)

    # key.permute(1,2,0) -> (B, key_size, T3); value.permute(1,0,2) -> (B, T3, value_size)
    return (jnp.transpose(key_out, (1, 2, 0)),
            jnp.transpose(val_out, (1, 0, 2)),
            out_mask)
    # TODO(synk): torch pack_padded/pad_packed has no Pallas equivalent; its
    # semantics are reproduced via per-timestep length masking in the kernel.


# ----------------------------------------------------------------------------
if __name__ == "__main__":
    master = jax.random.PRNGKey(0)
    k_param, k_data, k_drop = jax.random.split(master, 3)

    params = init_params(k_param)

    # Two variable-length sequences (lengths divisible by 8 for the pyramid).
    kd1, kd2 = jax.random.split(k_data)
    seq_batch = [
        jax.random.normal(kd1, (16, FEAT_DIM), jnp.float32),
        jax.random.normal(kd2, (12, FEAT_DIM), jnp.float32),
    ]

    key, value, mask = listener_forward(seq_batch, params,
                                        training=True, dropout_key=k_drop)
    jax.block_until_ready((key, value, mask))

    assert key.shape == (2, KEY_SIZE, 2), key.shape        # (B, key_size, T//8)
    assert value.shape == (2, 2, VALUE_SIZE), value.shape  # (B, T//8, value_size)
    assert mask.shape == (2, 2), mask.shape                # (B, max(lens//8))
    print("KERNEL_OK")
</pallas_src>

<mosaic_0001>
module attributes {stable_mosaic.version = 11 : i64} {
  func.func @_pyramid_gx_kernel(%arg0: i32, %arg1: memref<64x40xbf16, #tpu.memory_space<vmem>>, %arg2: memref<64x40xbf16, #tpu.memory_space<vmem>>, %arg3: memref<40x2048xbf16, #tpu.memory_space<vmem>>, %arg4: memref<40x2048xbf16, #tpu.memory_space<vmem>>, %arg5: memref<64x2048xbf16, #tpu.memory_space<vmem>>) attributes {dimension_semantics = [#tpu.dimension_semantics<parallel>], iteration_bounds = array<i64: 1>, scalar_prefetch = 0 : i64, scratch_operands = 0 : i64, tpu.core_type = #tpu.core_type<tc>, window_params = [{transform_indices = @transform_0, window_bounds = array<i64: 64, 40>}, {transform_indices = @transform_1, window_bounds = array<i64: 64, 40>}, {pipeline_mode = #tpu.pipeline_mode<synchronous>, transform_indices = @transform_2, window_bounds = array<i64: 40, 2048>}, {pipeline_mode = #tpu.pipeline_mode<synchronous>, transform_indices = @transform_3, window_bounds = array<i64: 40, 2048>}, {transform_indices = @transform_4, window_bounds = array<i64: 64, 2048>}]} {
    %c0 = arith.constant 0 : index
    %c0_0 = arith.constant 0 : index
    %0 = vector.load %arg1[%c0, %c0_0] : memref<64x40xbf16, #tpu.memory_space<vmem>>, vector<64x40xbf16>
    %c0_1 = arith.constant 0 : index
    %c0_2 = arith.constant 0 : index
    %1 = vector.load %arg3[%c0_1, %c0_2] : memref<40x2048xbf16, #tpu.memory_space<vmem>>, vector<40x2048xbf16>
    %cst = arith.constant dense<0.000000e+00> : vector<64x2048xf32>
    %2 = tpu.matmul %0, %1, %cst {dimension_numbers = #tpu.dot_dimension_numbers<[1], [0], [0], [1], [0, 0, 1, 1], [], []>} : vector<64x40xbf16>, vector<40x2048xbf16>, vector<64x2048xf32> -> vector<64x2048xf32>
    %c0_3 = arith.constant 0 : index
    %c0_4 = arith.constant 0 : index
    %3 = vector.load %arg2[%c0_3, %c0_4] : memref<64x40xbf16, #tpu.memory_space<vmem>>, vector<64x40xbf16>
    %c0_5 = arith.constant 0 : index
    %c0_6 = arith.constant 0 : index
    %4 = vector.load %arg4[%c0_5, %c0_6] : memref<40x2048xbf16, #tpu.memory_space<vmem>>, vector<40x2048xbf16>
    %cst_7 = arith.constant dense<0.000000e+00> : vector<64x2048xf32>
    %5 = tpu.matmul %3, %4, %cst_7 {dimension_numbers = #tpu.dot_dimension_numbers<[1], [0], [0], [1], [0, 0, 1, 1], [], []>} : vector<64x40xbf16>, vector<40x2048xbf16>, vector<64x2048xf32> -> vector<64x2048xf32>
    %6 = arith.addf %2, %5 : vector<64x2048xf32>
    %7 = arith.truncf %6 : vector<64x2048xf32> to vector<64x2048xbf16>
    %c0_8 = arith.constant 0 : index
    %c0_9 = arith.constant 0 : index
    %8 = vector.load %arg5[%c0_8, %c0_9] : memref<64x2048xbf16, #tpu.memory_space<vmem>>, vector<64x2048xbf16>
    tpu.vector_store %arg5[%c0_8, %c0_9], %7 {strides = array<i32>} : memref<64x2048xbf16, #tpu.memory_space<vmem>>, vector<64x2048xbf16>,
    return
  }
  func.func @transform_0(%arg0: i32) -> (i32, i32) {
    %c0_i32 = arith.constant 0 : i32
    %c0_i32_0 = arith.constant 0 : i32
    return %arg0, %c0_i32 : i32, i32
  }
  func.func @transform_1(%arg0: i32) -> (i32, i32) {
    %c0_i32 = arith.constant 0 : i32
    %c0_i32_0 = arith.constant 0 : i32
    return %arg0, %c0_i32 : i32, i32
  }
  func.func @transform_2(%arg0: i32) -> (i32, i32) {
    %c0_i32 = arith.constant 0 : i32
    %c0_i32_0 = arith.constant 0 : i32
    %c0_i32_1 = arith.constant 0 : i32
    return %c0_i32, %c0_i32_0 : i32, i32
  }
  func.func @transform_3(%arg0: i32) -> (i32, i32) {
    %c0_i32 = arith.constant 0 : i32
    %c0_i32_0 = arith.constant 0 : i32
    %c0_i32_1 = arith.constant 0 : i32
    return %c0_i32, %c0_i32_0 : i32, i32
  }
  func.func @transform_4(%arg0: i32) -> (i32, i32) {
    %c0_i32 = arith.constant 0 : i32
    %c0_i32_0 = arith.constant 0 : i32
    return %arg0, %c0_i32 : i32, i32
  }
}

</mosaic_0001>

<llo_original>
// kernel: tpu_custom_call.1
$region0: #{tpu_custom_call.1}
  #allocation0 [shape = 'u32[]', space=smem, size = 0x4, offset = 0x4, fixed_abs, tag = 'smem constant byte address 0x4 - core index']
  #allocation1 [shape = 'u32[144,128]{1,0:T(1,128)}', space=vmem, size = 0x12000, scoped, tag = 'internal scratch']
  %s0 = inlined_call_operand.vmem [shape: bf16[64,40], index: 0, kind: input, shape index: {}]
  %s1 = inlined_call_operand.vmem [shape: bf16[64,40], index: 1, kind: input, shape index: {}]
  %s2 = inlined_call_operand.hbm [shape: bf16[40,2048], index: 2, kind: input, shape index: {}]
  %s3 = inlined_call_operand.hbm [shape: bf16[40,2048], index: 3, kind: input, shape index: {}]
  %s4 = inlined_call_operand.hbm [shape: bf16[64,2048], index: 4, kind: output, shape index: {}]
  %s5 = sld [smem:[#allocation0]]
  $region34: #{tpu_custom_call.1} parent=0
    _
  %s7 = ssub.s32 1, %s5
  %s8 = scalar_select 0, %s7, %s5
  $region1: #{tpu_custom_call.1} parent=0
    #allocation2 [shape = 'u8[163840]{0}', space=vmem, size = 0x28000, scoped, tag = 'input window, operand 2, single buffered']
    #allocation3 [shape = 's32[1]{0}', space=sflag, size = 0x4, scoped, tag = 'scoped memory for tpu_custom_call.1']
    #allocation4 [shape = 's32[1]{0}', space=sflag, size = 0x4, scoped, tag = 'scoped memory for tpu_custom_call.1']
    #allocation5 [shape = 'u8[163840]{0}', space=vmem, size = 0x28000, scoped, tag = 'input window, operand 3, single buffered']
    #allocation6 [shape = 's32[1]{0}', space=sflag, size = 0x4, scoped, tag = 'scoped memory for tpu_custom_call.1']
    #allocation7 [shape = 'u8[262144]{0}', space=vmem, size = 0x40000, scoped, tag = 'output window, operand 0, single buffered']
    %9 = vsyncpa [#allocation3], 0
    %10 = vsyncpa [#allocation6], 0
    %11 = vsyncpa [#allocation4], 0
    // Predicated region
    $region2: #{tpu_custom_call.1} parent=1 // pred_check
      _
    $region3: #{tpu_custom_call.1} parent=1 // pred_check_branch
      %13 = sbr.rel (0) target = $region5
    $region4: #{tpu_custom_call.1} parent=1 // pred_region
      _
    $region5: #{tpu_custom_call.1} parent=1 // pred_fallthru
      _
    // Predicated region
    $region6: #{tpu_custom_call.1} parent=1 // pred_check
      _
    $region7: #{tpu_custom_call.1} parent=1 // pred_check_branch
      %15 = sbr.rel (0) target = $region9
    $region8: #{tpu_custom_call.1} parent=1 // pred_region
      _
    $region9: #{tpu_custom_call.1} parent=1 // pred_fallthru
      _
    // Predicated region
    $region10: #{tpu_custom_call.1} parent=1 // pred_check
      _
    $region11: #{tpu_custom_call.1} parent=1 // pred_check_branch
      %17 = sbr.rel (0) target = $region13
    $region12: #{tpu_custom_call.1} parent=1 // pred_region
      %s19 = ssub.s32 5120, 5120
      %20 = vsyncadd [#allocation3], %s19
      %s21 = sshll.u32 [#allocation2], 4
      %s22 = int_to_ptr.vmem [resolvable:$true] %s21
      %27 = dma.hbm_to_vmem [thread:$0]  %s2, 5120, %s22, [#allocation3], 1024, 1024, 64
    $region13: #{tpu_custom_call.1} parent=1 // pred_fallthru
      _
    // Predicated region
    $region14: #{tpu_custom_call.1} parent=1 // pred_check
      _
    $region15: #{tpu_custom_call.1} parent=1 // pred_check_branch
      %29 = sbr.rel (0) target = $region17
    $region16: #{tpu_custom_call.1} parent=1 // pred_region
      %s31 = ssub.s32 5120, 5120
      %32 = vsyncadd [#allocation6], %s31
      %s33 = sshll.u32 [#allocation5], 4
      %s34 = int_to_ptr.vmem [resolvable:$true] %s33
      %39 = dma.hbm_to_vmem [thread:$0]  %s3, 5120, %s34, [#allocation6], 1024, 1024, 64
    $region17: #{tpu_custom_call.1} parent=1 // pred_fallthru
      _
    // Predicated region
    $region18: #{tpu_custom_call.1} parent=1 // pred_check
      _
    $region19: #{tpu_custom_call.1} parent=1 // pred_check_branch
      %41 = sbr.rel (0) target = $region21
    $region20: #{tpu_custom_call.1} parent=1 // pred_region
      %42 = dma.done [#allocation3], 5120
    $region21: #{tpu_custom_call.1} parent=1 // pred_fallthru
      _
    // Predicated region
    $region22: #{tpu_custom_call.1} parent=1 // pred_check
      _
    $region23: #{tpu_custom_call.1} parent=1 // pred_check_branch
      %44 = sbr.rel (0) target = $region25
    $region24: #{tpu_custom_call.1} parent=1 // pred_region
      %45 = dma.done [#allocation6], 5120
    $region25: #{tpu_custom_call.1} parent=1 // pred_fallthru
      _
    %v47 = vld [vmem:[%s0] sm:$0xf]
    %v48 = vld [vmem:[%s0 + $0x4] sm:$0xf]
    %v49 = vld [vmem:[%s0 + $0x8] sm:$0xf]
    %v50 = vld [vmem:[%s0 + $0xc] sm:$0xf]
    %v51 = vld [vmem:[%s0 + $0x10] sm:$0xf]
    %v52 = vld [vmem:[%s0 + $0x14] sm:$0xf]
    %v53 = vld [vmem:[%s0 + $0x18] sm:$0xf]
    %v54 = vld [vmem:[%s0 + $0x1c] sm:$0xf]
    %v55 = vld [vmem:[#allocation2] sm:$0xff]
    %v56 = vld [vmem:[#allocation2 + $0x8] sm:$0xff]
    %v57 = vld [vmem:[#allocation2 + $0x10] sm:$0xff]
    %v58 = vld [vmem:[#allocation2 + $0x18] sm:$0xff]
    %v59 = vld [vmem:[#allocation2 + $0x20] sm:$0xff]
    %v60 = vld [vmem:[#allocation2 + $0x28] sm:$0xff]
    %v61 = vld [vmem:[#allocation2 + $0x30] sm:$0xff]
    %v62 = vld [vmem:[#allocation2 + $0x38] sm:$0xff]
    %v63 = vld [vmem:[#allocation2 + $0x40] sm:$0xff]
    %v64 = vld [vmem:[#allocation2 + $0x48] sm:$0xff]
    %v65 = vld [vmem:[#allocation2 + $0x50] sm:$0xff]
    %v66 = vld [vmem:[#allocation2 + $0x58] sm:$0xff]
    %v67 = vld [vmem:[#allocation2 + $0x60] sm:$0xff]
    %v68 = vld [vmem:[#allocation2 + $0x68] sm:$0xff]
    %v69 = vld [vmem:[#allocation2 + $0x70] sm:$0xff]
    %v70 = vld [vmem:[#allocation2 + $0x78] sm:$0xff]
    %v71 = vld [vmem:[#allocation2 + $0x80] sm:$0xff]
    %v72 = vld [vmem:[#allocation2 + $0x88] sm:$0xff]
    %v73 = vld [vmem:[#allocation2 + $0x90] sm:$0xff]
    %v74 = vld [vmem:[#allocation2 + $0x98] sm:$0xff]
    %v75 = vld [vmem:[#allocation2 + $0xa0] sm:$0xff]
    %v76 = vld [vmem:[#allocation2 + $0xa8] sm:$0xff]
    %v77 = vld [vmem:[#allocation2 + $0xb0] sm:$0xff]
    %v78 = vld [vmem:[#allocation2 + $0xb8] sm:$0xff]
    %v79 = vld [vmem:[#allocation2 + $0xc0] sm:$0xff]
    %v80 = vld [vmem:[#allocation2 + $0xc8] sm:$0xff]
    %v81 = vld [vmem:[#allocation2 + $0xd0] sm:$0xff]
    %v82 = vld [vmem:[#allocation2 + $0xd8] sm:$0xff]
    %v83 = vld [vmem:[#allocation2 + $0xe0] sm:$0xff]
    %v84 = vld [vmem:[#allocation2 + $0xe8] sm:$0xff]
    %v85 = vld [vmem:[#allocation2 + $0xf0] sm:$0xff]
    %v86 = vld [vmem:[#allocation2 + $0xf8] sm:$0xff]
    %v87 = vld [vmem:[#allocation2 + $0x100] sm:$0xff]
    %v88 = vld [vmem:[#allocation2 + $0x108] sm:$0xff]
    %v89 = vld [vmem:[#allocation2 + $0x110] sm:$0xff]
    %v90 = vld [vmem:[#allocation2 + $0x118] sm:$0xff]
    %v91 = vld [vmem:[#allocation2 + $0x120] sm:$0xff]
    %v92 = vld [vmem:[#allocation2 + $0x128] sm:$0xff]
    %v93 = vld [vmem:[#allocation2 + $0x130] sm:$0xff]
    %v94 = vld [vmem:[#allocation2 + $0x138] sm:$0xff]
    %v95 = vld [vmem:[%s1] sm:$0xf]
    %v96 = vld [vmem:[%s1 + $0x4] sm:$0xf]
    %v97 = vld [vmem:[%s1 + $0x8] sm:$0xf]
    %v98 = vld [vmem:[%s1 + $0xc] sm:$0xf]
    %v99 = vld [vmem:[%s1 + $0x10] sm:$0xf]
    %v100 = vld [vmem:[%s1 + $0x14] sm:$0xf]
    %v101 = vld [vmem:[%s1 + $0x18] sm:$0xf]
    %v102 = vld [vmem:[%s1 + $0x1c] sm:$0xf]
    %v103 = vld [vmem:[#allocation5] sm:$0xff]
    %v104 = vld [vmem:[#allocation5 + $0x8] sm:$0xff]
    %v105 = vld [vmem:[#allocation5 + $0x10] sm:$0xff]
    %v106 = vld [vmem:[#allocation5 + $0x18] sm:$0xff]
    %v107 = vld [vmem:[#allocation5 + $0x20] sm:$0xff]
    %v108 = vld [vmem:[#allocation5 + $0x28] sm:$0xff]
    %v109 = vld [vmem:[#allocation5 + $0x30] sm:$0xff]
    %v110 = vld [vmem:[#allocation5 + $0x38] sm:$0xff]
    %v111 = vld [vmem:[#allocation5 + $0x40] sm:$0xff]
    %v112 = vld [vmem:[#allocation5 + $0x48] sm:$0xff]
    %v113 = vld [vmem:[#allocation5 + $0x50] sm:$0xff]
    %v114 = vld [vmem:[#allocation5 + $0x58] sm:$0xff]
    %v115 = vld [vmem:[#allocation5 + $0x60] sm:$0xff]
    %v116 = vld [vmem:[#allocation5 + $0x68] sm:$0xff]
    %v117 = vld [vmem:[#allocation5 + $0x70] sm:$0xff]
    %v118 = vld [vmem:[#allocation5 + $0x78] sm:$0xff]
    %v119 = vld [vmem:[#allocation5 + $0x80] sm:$0xff]
    %v120 = vld [vmem:[#allocation5 + $0x88] sm:$0xff]
    %v121 = vld [vmem:[#allocation5 + $0x90] sm:$0xff]
    %v122 = vld [vmem:[#allocation5 + $0x98] sm:$0xff]
    %v123 = vld [vmem:[#allocation5 + $0xa0] sm:$0xff]
    %v124 = vld [vmem:[#allocation5 + $0xa8] sm:$0xff]
    %v125 = vld [vmem:[#allocation5 + $0xb0] sm:$0xff]
    %v126 = vld [vmem:[#allocation5 + $0xb8] sm:$0xff]
    %v127 = vld [vmem:[#allocation5 + $0xc0] sm:$0xff]
    %v128 = vld [vmem:[#allocation5 + $0xc8] sm:$0xff]
    %v129 = vld [vmem:[#allocation5 + $0xd0] sm:$0xff]
    %v130 = vld [vmem:[#allocation5 + $0xd8] sm:$0xff]
    %v131 = vld [vmem:[#allocation5 + $0xe0] sm:$0xff]
    %v132 = vld [vmem:[#allocation5 + $0xe8] sm:$0xff]
    %v133 = vld [vmem:[#allocation5 + $0xf0] sm:$0xff]
    %v134 = vld [vmem:[#allocation5 + $0xf8] sm:$0xff]
    %v135 = vld [vmem:[#allocation5 + $0x100] sm:$0xff]
    %v136 = vld [vmem:[#allocation5 + $0x108] sm:$0xff]
    %v137 = vld [vmem:[#allocation5 + $0x110] sm:$0xff]
    %v138 = vld [vmem:[#allocation5 + $0x118] sm:$0xff]
    %v139 = vld [vmem:[#allocation5 + $0x120] sm:$0xff]
    %v140 = vld [vmem:[#allocation5 + $0x128] sm:$0xff]
    %v141 = vld [vmem:[#allocation5 + $0x130] sm:$0xff]
    %v142 = vld [vmem:[#allocation5 + $0x138] sm:$0xff]
    %v151 = vunpack.c.l.b16 %v95
    %v152 = vunpack.c.l.b16 %v96
    %v153 = vunpack.c.l.b16 %v97
    %v154 = vunpack.c.l.b16 %v98
    %v155 = vunpack.c.l.b16 %v99
    %v156 = vunpack.c.l.b16 %v100
    %v157 = vunpack.c.l.b16 %v101
    %v158 = vunpack.c.l.b16 %v102
    %v159 = vpack.c.b16 %v152, %v151
    %v160 = vpack.c.b16 %v154, %v153
    %v161 = vpack.c.b16 %v156, %v155
    %v162 = vpack.c.b16 %v158, %v157
    %v203 = vunpack.c.l.b16 %v103
    %v204 = vunpack.c.h.b16 %v103
    %v205 = vunpack.c.l.b16 %v104
    %v206 = vunpack.c.h.b16 %v104
    %v207 = vunpack.c.l.b16 %v105
    %v208 = vunpack.c.h.b16 %v105
    %v209 = vunpack.c.l.b16 %v106
    %v210 = vunpack.c.h.b16 %v106
    %v211 = vunpack.c.l.b16 %v107
    %v212 = vunpack.c.h.b16 %v107
    %v213 = vunpack.c.l.b16 %v108
    %v214 = vunpack.c.h.b16 %v108
    %v215 = vunpack.c.l.b16 %v109
    %v216 = vunpack.c.h.b16 %v109
    %v217 = vunpack.c.l.b16 %v110
    %v218 = vunpack.c.h.b16 %v110
    %v219 = vunpack.c.l.b16 %v111
    %v220 = vunpack.c.h.b16 %v111
    %v221 = vunpack.c.l.b16 %v112
    %v222 = vunpack.c.h.b16 %v112
    %v223 = vunpack.c.l.b16 %v113
    %v224 = vunpack.c.h.b16 %v113
    %v225 = vunpack.c.l.b16 %v114
    %v226 = vunpack.c.h.b16 %v114
    %v227 = vunpack.c.l.b16 %v115
    %v228 = vunpack.c.h.b16 %v115
    %v229 = vunpack.c.l.b16 %v116
    %v230 = vunpack.c.h.b16 %v116
    %v231 = vunpack.c.l.b16 %v117
    %v232 = vunpack.c.h.b16 %v117
    %v233 = vunpack.c.l.b16 %v118
    %v234 = vunpack.c.h.b16 %v118
    %v235 = vunpack.c.l.b16 %v119
    %v236 = vunpack.c.h.b16 %v119
    %v237 = vunpack.c.l.b16 %v120
    %v238 = vunpack.c.h.b16 %v120
    %v239 = vunpack.c.l.b16 %v121
    %v240 = vunpack.c.h.b16 %v121
    %v241 = vunpack.c.l.b16 %v122
    %v242 = vunpack.c.h.b16 %v122
    %v243 = vunpack.c.l.b16 %v123
    %v244 = vunpack.c.h.b16 %v123
    %v245 = vunpack.c.l.b16 %v124
    %v246 = vunpack.c.h.b16 %v124
    %v247 = vunpack.c.l.b16 %v125
    %v248 = vunpack.c.h.b16 %v125
    %v249 = vunpack.c.l.b16 %v126
    %v250 = vunpack.c.h.b16 %v126
    %v251 = vunpack.c.l.b16 %v127
    %v252 = vunpack.c.h.b16 %v127
    %v253 = vunpack.c.l.b16 %v128
    %v254 = vunpack.c.h.b16 %v128
    %v255 = vunpack.c.l.b16 %v129
    %v256 = vunpack.c.h.b16 %v129
    %v257 = vunpack.c.l.b16 %v130
    %v258 = vunpack.c.h.b16 %v130
    %v259 = vunpack.c.l.b16 %v131
    %v260 = vunpack.c.h.b16 %v131
    %v261 = vunpack.c.l.b16 %v132
    %v262 = vunpack.c.h.b16 %v132
    %v263 = vunpack.c.l.b16 %v133
    %v264 = vunpack.c.h.b16 %v133
    %v265 = vunpack.c.l.b16 %v134
    %v266 = vunpack.c.h.b16 %v134
    %v267 = vunpack.c.l.b16 %v135
    %v268 = vunpack.c.h.b16 %v135
    %v269 = vunpack.c.l.b16 %v136
    %v270 = vunpack.c.h.b16 %v136
    %v271 = vunpack.c.l.b16 %v137
    %v272 = vunpack.c.h.b16 %v137
    %v273 = vunpack.c.l.b16 %v138
    %v274 = vunpack.c.h.b16 %v138
    %v275 = vunpack.c.l.b16 %v139
    %v276 = vunpack.c.h.b16 %v139
    %v277 = vunpack.c.l.b16 %v140
    %v278 = vunpack.c.h.b16 %v140
    %v279 = vunpack.c.l.b16 %v141
    %v280 = vunpack.c.h.b16 %v141
    %v281 = vunpack.c.l.b16 %v142
    %v282 = vunpack.c.h.b16 %v142
    %v283 = vpack.c.b16 %v219, %v203
    %v284 = vpack.c.b16 %v220, %v204
    %v285 = vpack.c.b16 %v221, %v205
    %v286 = vpack.c.b16 %v222, %v206
    %v287 = vpack.c.b16 %v223, %v207
    %v288 = vpack.c.b16 %v224, %v208
    %v289 = vpack.c.b16 %v225, %v209
    %v290 = vpack.c.b16 %v226, %v210
    %v291 = vpack.c.b16 %v227, %v211
    %v292 = vpack.c.b16 %v228, %v212
    %v293 = vpack.c.b16 %v229, %v213
    %v294 = vpack.c.b16 %v230, %v214
    %v295 = vpack.c.b16 %v231, %v215
    %v296 = vpack.c.b16 %v232, %v216
    %v297 = vpack.c.b16 %v233, %v217
    %v298 = vpack.c.b16 %v234, %v218
    %v299 = vpack.c.b16 %v251, %v235
    %v300 = vpack.c.b16 %v252, %v236
    %v301 = vpack.c.b16 %v253, %v237
    %v302 = vpack.c.b16 %v254, %v238
    %v303 = vpack.c.b16 %v255, %v239
    %v304 = vpack.c.b16 %v256, %v240
    %v305 = vpack.c.b16 %v257, %v241
    %v306 = vpack.c.b16 %v258, %v242
    %v307 = vpack.c.b16 %v259, %v243
    %v308 = vpack.c.b16 %v260, %v244
    %v309 = vpack.c.b16 %v261, %v245
    %v310 = vpack.c.b16 %v262, %v246
    %v311 = vpack.c.b16 %v263, %v247
    %v312 = vpack.c.b16 %v264, %v248
    %v313 = vpack.c.b16 %v265, %v249
    %v314 = vpack.c.b16 %v266, %v250
    %v315 = vpack.c.b16 %v267, %v267
    %v316 = vpack.c.b16 %v268, %v268
    %v317 = vpack.c.b16 %v269, %v269
    %v318 = vpack.c.b16 %v270, %v270
    %v319 = vpack.c.b16 %v271, %v271
    %v320 = vpack.c.b16 %v272, %v272
    %v321 = vpack.c.b16 %v273, %v273
    %v322 = vpack.c.b16 %v274, %v274
    %v323 = vpack.c.b16 %v275, %v275
    %v324 = vpack.c.b16 %v276, %v276
    %v325 = vpack.c.b16 %v277, %v277
    %v326 = vpack.c.b16 %v278, %v278
    %v327 = vpack.c.b16 %v279, %v279
    %v328 = vpack.c.b16 %v280, %v280
    %v329 = vpack.c.b16 %v281, %v281
    %v330 = vpack.c.b16 %v282, %v282
    %vm363 = vcmask 326656
    %v365 = vsel %vm363, %v159, 0
    %v368 = vsel %vm363, %v160, 0
    %v371 = vsel %vm363, %v161, 0
    %v374 = vsel %vm363, %v162, 0
    %vm376 = vcmask 1043456
    %v378 = vsel %vm376, %v315, 0
    %v381 = vsel %vm376, %v316, 0
    %v384 = vsel %vm376, %v317, 0
    %v387 = vsel %vm376, %v318, 0
    %v390 = vsel %vm376, %v319, 0
    %v393 = vsel %vm376, %v320, 0
    %v396 = vsel %vm376, %v321, 0
    %v399 = vsel %vm376, %v322, 0
    %v402 = vsel %vm376, %v323, 0
    %v405 = vsel %vm376, %v324, 0
    %v408 = vsel %vm376, %v325, 0
    %v411 = vsel %vm376, %v326, 0
    %v414 = vsel %vm376, %v327, 0
    %v417 = vsel %vm376, %v328, 0
    %v420 = vsel %vm376, %v329, 0
    %v423 = vsel %vm376, %v330, 0
    %425 = vmatprep.subr.bf16.mxu0 %v284
    %426 = vmatpush1.bf16.msra.mxu0 %v283
    %427 = vmatprep.subr.bf16.mxu0 %v300
    %428 = vmatpush1.bf16.msra.mxu0 %v299
    %429 = vmatprep.subr.bf16.mxu0 %v381
    %430 = vmatpush1.bf16.msra.mxu0 %v378
    %431 = vmatprep.subr.bf16.mxu0 0
    %432 = vmatpush1.bf16.msra.mxu0 0
    %433 = vmatprep.subr.bf16.mxu0 0
    %434 = vmatpush1.bf16.msra.mxu0 0
    %435 = vmatprep.subr.bf16.mxu0 0
    %436 = vmatpush1.bf16.msra.mxu0 0
    %437 = vmatprep.subr.bf16.mxu0 0
    %438 = vmatpush1.bf16.msra.mxu0 0
    %439 = vmatprep.subr.bf16.mxu0 0
    %440 = vmatpush1.bf16.msra.mxu0 0
    %441 = vmatprep.subr.bf16.mxu0 0
    %442 = vmatpush1.bf16.msra.mxu0 0
    %443 = vmatprep.subr.bf16.mxu0 0
    %444 = vmatpush1.bf16.msra.mxu0 0
    %445 = vmatprep.subr.bf16.mxu0 0
    %446 = vmatpush1.bf16.msra.mxu0 0
    %447 = vmatprep.subr.bf16.mxu0 0
    %448 = vmatpush1.bf16.msra.mxu0 0
    %449 = vmatprep.subr.bf16.mxu0 0
    %450 = vmatpush1.bf16.msra.mxu0 0
    %451 = vmatprep.subr.bf16.mxu0 0
    %452 = vmatpush1.bf16.msra.mxu0 0
    %453 = vmatprep.subr.bf16.mxu0 0
    %454 = vmatpush1.bf16.msra.mxu0 0
    %455 = vmatprep.subr.bf16.mxu0 0
    %456 = vmatpush1.bf16.msra.mxu0 0
    %457 = vmatprep.mubr.bf16.mxu0 0
    %458 = vmatmul.mubr.bf16.gmra.mrb[0].mxu0 %v365
    %v459 = vpop.f32.mrb[0].mxu0
    %v460 = vadd.f32 0.0, %v459
    %v461 = vpop.f32.mrb[0].mxu0
    %v462 = vadd.f32 0.0, %v461
    %v463 = vpop.f32.mrb[0].mxu0
    %v464 = vadd.f32 0.0, %v463
    %v465 = vpop.f32.mrb[0].mxu0
    %v466 = vadd.f32 0.0, %v465
    %467 = vmatprep.mubr.bf16.mxu0 0
    %468 = vmatmul.mubr.bf16.gmra.mrb[0].mxu0 %v368
    %v469 = vpop.f32.mrb[0].mxu0
    %v470 = vadd.f32 0.0, %v469
    %v471 = vpop.f32.mrb[0].mxu0
    %v472 = vadd.f32 0.0, %v471
    %v473 = vpop.f32.mrb[0].mxu0
    %v474 = vadd.f32 0.0, %v473
    %v475 = vpop.f32.mrb[0].mxu0
    %v476 = vadd.f32 0.0, %v475
    %477 = vmatprep.mubr.bf16.mxu0 0
    %478 = vmatmul.mubr.bf16.gmra.mrb[0].mxu0 %v371
    %v479 = vpop.f32.mrb[0].mxu0
    %v480 = vadd.f32 0.0, %v479
    %v481 = vpop.f32.mrb[0].mxu0
    %v482 = vadd.f32 0.0, %v481
    %v483 = vpop.f32.mrb[0].mxu0
    %v484 = vadd.f32 0.0, %v483
    %v485 = vpop.f32.mrb[0].mxu0
    %v486 = vadd.f32 0.0, %v485
    %487 = vmatprep.mubr.bf16.mxu0 0
    %488 = vmatmul.mubr.bf16.gmra.mrb[0].mxu0 %v374
    %v489 = vpop.f32.mrb[0].mxu0
    %v490 = vadd.f32 0.0, %v489
    %v491 = vpop.f32.mrb[0].mxu0
    %v492 = vadd.f32 0.0, %v491
    %v493 = vpop.f32.mrb[0].mxu0
    %v494 = vadd.f32 0.0, %v493
    %v495 = vpop.f32.mrb[0].mxu0
    %v496 = vadd.f32 0.0, %v495
    %497 = vdwg.mxu0
    %498 = vmatprep.subr.bf16.mxu0 %v286
    %499 = vmatpush1.bf16.msra.mxu0 %v285
    %500 = vmatprep.subr.bf16.mxu0 %v302
    %501 = vmatpush1.bf16.msra.mxu0 %v301
    %502 = vmatprep.subr.bf16.mxu0 %v387
    %503 = vmatpush1.bf16.msra.mxu0 %v384
    %504 = vmatprep.subr.bf16.mxu0 0
    %505 = vmatpush1.bf16.msra.mxu0 0
    %506 = vmatprep.subr.bf16.mxu0 0
    %507 = vmatpush1.bf16.msra.mxu0 0
    %508 = vmatprep.subr.bf16.mxu0 0
    %509 = vmatpush1.bf16.msra.mxu0 0
    %510 = vmatprep.subr.bf16.mxu0 0
    %511 = vmatpush1.bf16.msra.mxu0 0
    %512 = vmatprep.subr.bf16.mxu0 0
    %513 = vmatpush1.bf16.msra.mxu0 0
    %514 = vmatprep.subr.bf16.mxu0 0
    %515 = vmatpush1.bf16.msra.mxu0 0
    %516 = vmatprep.subr.bf16.mxu0 0
    %517 = vmatpush1.bf16.msra.mxu0 0
    %518 = vmatprep.subr.bf16.mxu0 0
    %519 = vmatpush1.bf16.msra.mxu0 0
    %520 = vmatprep.subr.bf16.mxu0 0
    %521 = vmatpush1.bf16.msra.mxu0 0
    %522 = vmatprep.subr.bf16.mxu0 0
    %523 = vmatpush1.bf16.msra.mxu0 0
    %524 = vmatprep.subr.bf16.mxu0 0
    %525 = vmatpush1.bf16.msra.mxu0 0
    %526 = vmatprep.subr.bf16.mxu0 0
    %527 = vmatpush1.bf16.msra.mxu0 0
    %528 = vmatprep.subr.bf16.mxu0 0
    %529 = vmatpush1.bf16.msra.mxu0 0
    %530 = vmatprep.mubr.bf16.mxu0 0
    %531 = vmatmul.mubr.bf16.gmra.mrb[0].mxu0 %v365
    %v532 = vpop.f32.mrb[0].mxu0
    %v533 = vadd.f32 0.0, %v532
    %v534 = vpop.f32.mrb[0].mxu0
    %v535 = vadd.f32 0.0, %v534
    %v536 = vpop.f32.mrb[0].mxu0
    %v537 = vadd.f32 0.0, %v536
    %v538 = vpop.f32.mrb[0].mxu0
    %v539 = vadd.f32 0.0, %v538
    %540 = vmatprep.mubr.bf16.mxu0 0
    %541 = vmatmul.mubr.bf16.gmra.mrb[0].mxu0 %v368
    %v542 = vpop.f32.mrb[0].mxu0
    %v543 = vadd.f32 0.0, %v542
    %v544 = vpop.f32.mrb[0].mxu0
    %v545 = vadd.f32 0.0, %v544
    %v546 = vpop.f32.mrb[0].mxu0
    %v547 = vadd.f32 0.0, %v546
    %v548 = vpop.f32.mrb[0].mxu0
    %v549 = vadd.f32 0.0, %v548
    %550 = vmatprep.mubr.bf16.mxu0 0
    %551 = vmatmul.mubr.bf16.gmra.mrb[0].mxu0 %v371
    %v552 = vpop.f32.mrb[0].mxu0
    %v553 = vadd.f32 0.0, %v552
    %v554 = vpop.f32.mrb[0].mxu0
    %v555 = vadd.f32 0.0, %v554
    %v556 = vpop.f32.mrb[0].mxu0
    %v557 = vadd.f32 0.0, %v556
    %v558 = vpop.f32.mrb[0].mxu0
    %v559 = vadd.f32 0.0, %v558
    %560 = vmatprep.mubr.bf16.mxu0 0
    %561 = vmatmul.mubr.bf16.gmra.mrb[0].mxu0 %v374
    %v562 = vpop.f32.mrb[0].mxu0
    %v563 = vadd.f32 0.0, %v562
    %v564 = vpop.f32.mrb[0].mxu0
    %v565 = vadd.f32 0.0, %v564
    %v566 = vpop.f32.mrb[0].mxu0
    %v567 = vadd.f32 0.0, %v566
    %v568 = vpop.f32.mrb[0].mxu0
    %v569 = vadd.f32 0.0, %v568
    %570 = vdwg.mxu0
    %571 = vmatprep.subr.bf16.mxu0 %v288
    %572 = vmatpush1.bf16.msra.mxu0 %v287
    %573 = vmatprep.subr.bf16.mxu0 %v304
    %574 = vmatpush1.bf16.msra.mxu0 %v303
    %575 = vmatprep.subr.bf16.mxu0 %v393
    %576 = vmatpush1.bf16.msra.mxu0 %v390
    %577 = vmatprep.subr.bf16.mxu0 0
    %578 = vmatpush1.bf16.msra.mxu0 0
    %579 = vmatprep.subr.bf16.mxu0 0
    %580 = vmatpush1.bf16.msra.mxu0 0
    %581 = vmatprep.subr.bf16.mxu0 0
    %582 = vmatpush1.bf16.msra.mxu0 0
    %583 = vmatprep.subr.bf16.mxu0 0
    %584 = vmatpush1.bf16.msra.mxu0 0
    %585 = vmatprep.subr.bf16.mxu0 0
    %586 = vmatpush1.bf16.msra.mxu0 0
    %587 = vmatprep.subr.bf16.mxu0 0
    %588 = vmatpush1.bf16.msra.mxu0 0
    %589 = vmatprep.subr.bf16.mxu0 0
    %590 = vmatpush1.bf16.msra.mxu0 0
    %591 = vmatprep.subr.bf16.mxu0 0
    %592 = vmatpush1.bf16.msra.mxu0 0
    %593 = vmatprep.subr.bf16.mxu0 0
    %594 = vmatpush1.bf16.msra.mxu0 0
    %595 = vmatprep.subr.bf16.mxu0 0
    %596 = vmatpush1.bf16.msra.mxu0 0
    %597 = vmatprep.subr.bf16.mxu0 0
    %598 = vmatpush1.bf16.msra.mxu0 0
    %599 = vmatprep.subr.bf16.mxu0 0
    %600 = vmatpush1.bf16.msra.mxu0 0
    %601 = vmatprep.subr.bf16.mxu0 0
    %602 = vmatpush1.bf16.msra.mxu0 0
    %603 = vmatprep.mubr.bf16.mxu0 0
    %604 = vmatmul.mubr.bf16.gmra.mrb[0].mxu0 %v365
    %v605 = vpop.f32.mrb[0].mxu0
    %v606 = vadd.f32 0.0, %v605
    %v607 = vpop.f32.mrb[0].mxu0
    %v608 = vadd.f32 0.0, %v607
    %v609 = vpop.f32.mrb[0].mxu0
    %v610 = vadd.f32 0.0, %v609
    %v611 = vpop.f32.mrb[0].mxu0
    %v612 = vadd.f32 0.0, %v611
    %613 = vmatprep.mubr.bf16.mxu0 0
    %614 = vmatmul.mubr.bf16.gmra.mrb[0].mxu0 %v368
    %v615 = vpop.f32.mrb[0].mxu0
    %v616 = vadd.f32 0.0, %v615
    %v617 = vpop.f32.mrb[0].mxu0
    %v618 = vadd.f32 0.0, %v617
    %v619 = vpop.f32.mrb[0].mxu0
    %v620 = vadd.f32 0.0, %v619
    %v621 = vpop.f32.mrb[0].mxu0
    %v622 = vadd.f32 0.0, %v621
    %623 = vmatprep.mubr.bf16.mxu0 0
    %624 = vmatmul.mubr.bf16.gmra.mrb[0].mxu0 %v371
    %v625 = vpop.f32.mrb[0].mxu0
    %v626 = vadd.f32 0.0, %v625
    %v627 = vpop.f32.mrb[0].mxu0
    %v628 = vadd.f32 0.0, %v627
    %v629 = vpop.f32.mrb[0].mxu0
    %v630 = vadd.f32 0.0, %v629
    %v631 = vpop.f32.mrb[0].mxu0
    %v632 = vadd.f32 0.0, %v631
    %633 = vmatprep.mubr.bf16.mxu0 0
    %634 = vmatmul.mubr.bf16.gmra.mrb[0].mxu0 %v374
    %v635 = vpop.f32.mrb[0].mxu0
    %v636 = vadd.f32 0.0, %v635
    %v637 = vpop.f32.mrb[0].mxu0
    %v638 = vadd.f32 0.0, %v637
    %v639 = vpop.f32.mrb[0].mxu0
    %v640 = vadd.f32 0.0, %v639
    %v641 = vpop.f32.mrb[0].mxu0
    %v642 = vadd.f32 0.0, %v641
    %643 = vdwg.mxu0
    %644 = vmatprep.subr.bf16.mxu0 %v290
    %645 = vmatpush1.bf16.msra.mxu0 %v289
    %646 = vmatprep.subr.bf16.mxu0 %v306
    %647 = vmatpush1.bf16.msra.mxu0 %v305
    %648 = vmatprep.subr.bf16.mxu0 %v399
    %649 = vmatpush1.bf16.msra.mxu0 %v396
    %650 = vmatprep.subr.bf16.mxu0 0
    %651 = vmatpush1.bf16.msra.mxu0 0
    %652 = vmatprep.subr.bf16.mxu0 0
    %653 = vmatpush1.bf16.msra.mxu0 0
    %654 = vmatprep.subr.bf16.mxu0 0
    %655 = vmatpush1.bf16.msra.mxu0 0
    %656 = vmatprep.subr.bf16.mxu0 0
    %657 = vmatpush1.bf16.msra.mxu0 0
    %658 = vmatprep.subr.bf16.mxu0 0
    %659 = vmatpush1.bf16.msra.mxu0 0
    %660 = vmatprep.subr.bf16.mxu0 0
    %661 = vmatpush1.bf16.msra.mxu0 0
    %662 = vmatprep.subr.bf16.mxu0 0
    %663 = vmatpush1.bf16.msra.mxu0 0
    %664 = vmatprep.subr.bf16.mxu0 0
    %665 = vmatpush1.bf16.msra.mxu0 0
    %666 = vmatprep.subr.bf16.mxu0 0
    %667 = vmatpush1.bf16.msra.mxu0 0
    %668 = vmatprep.subr.bf16.mxu0 0
    %669 = vmatpush1.bf16.msra.mxu0 0
    %670 = vmatprep.subr.bf16.mxu0 0
    %671 = vmatpush1.bf16.msra.mxu0 0
    %672 = vmatprep.subr.bf16.mxu0 0
    %673 = vmatpush1.bf16.msra.mxu0 0
    %674 = vmatprep.subr.bf16.mxu0 0
    %675 = vmatpush1.bf16.msra.mxu0 0
    %676 = vmatprep.mubr.bf16.mxu0 0
    %677 = vmatmul.mubr.bf16.gmra.mrb[0].mxu0 %v365
    %v678 = vpop.f32.mrb[0].mxu0
    %v679 = vadd.f32 0.0, %v678
    %v680 = vpop.f32.mrb[0].mxu0
    %v681 = vadd.f32 0.0, %v680
    %v682 = vpop.f32.mrb[0].mxu0
    %v683 = vadd.f32 0.0, %v682
    %v684 = vpop.f32.mrb[0].mxu0
    %v685 = vadd.f32 0.0, %v684
    %686 = vmatprep.mubr.bf16.mxu0 0
    %687 = vmatmul.mubr.bf16.gmra.mrb[0].mxu0 %v368
    %v688 = vpop.f32.mrb[0].mxu0
    %v689 = vadd.f32 0.0, %v688
    %v690 = vpop.f32.mrb[0].mxu0
    %v691 = vadd.f32 0.0, %v690
    %v692 = vpop.f32.mrb[0].mxu0
    %v693 = vadd.f32 0.0, %v692
    %v694 = vpop.f32.mrb[0].mxu0
    %v695 = vadd.f32 0.0, %v694
    %696 = vmatprep.mubr.bf16.mxu0 0
    %697 = vmatmul.mubr.bf16.gmra.mrb[0].mxu0 %v371
    %v698 = vpop.f32.mrb[0].mxu0
    %v699 = vadd.f32 0.0, %v698
    %v700 = vpop.f32.mrb[0].mxu0
    %v701 = vadd.f32 0.0, %v700
    %v702 = vpop.f32.mrb[0].mxu0
    %v703 = vadd.f32 0.0, %v702
    %v704 = vpop.f32.mrb[0].mxu0
    %v705 = vadd.f32 0.0, %v704
    %706 = vmatprep.mubr.bf16.mxu0 0
    %707 = vmatmul.mubr.bf16.gmra.mrb[0].mxu0 %v374
    %v708 = vpop.f32.mrb[0].mxu0
    %v709 = vadd.f32 0.0, %v708
    %v710 = vpop.f32.mrb[0].mxu0
    %v711 = vadd.f32 0.0, %v710
    %v712 = vpop.f32.mrb[0].mxu0
    %v713 = vadd.f32 0.0, %v712
    %v714 = vpop.f32.mrb[0].mxu0
    %v715 = vadd.f32 0.0, %v714
    %716 = vdwg.mxu0
    %717 = vmatprep.subr.bf16.mxu0 %v292
    %718 = vmatpush1.bf16.msra.mxu0 %v291
    %719 = vmatprep.subr.bf16.mxu0 %v308
    %720 = vmatpush1.bf16.msra.mxu0 %v307
    %721 = vmatprep.subr.bf16.mxu0 %v405
    %722 = vmatpush1.bf16.msra.mxu0 %v402
    %723 = vmatprep.subr.bf16.mxu0 0
    %724 = vmatpush1.bf16.msra.mxu0 0
    %725 = vmatprep.subr.bf16.mxu0 0
    %726 = vmatpush1.bf16.msra.mxu0 0
    %727 = vmatprep.subr.bf16.mxu0 0
    %728 = vmatpush1.bf16.msra.mxu0 0
    %729 = vmatprep.subr.bf16.mxu0 0
    %730 = vmatpush1.bf16.msra.mxu0 0
    %731 = vmatprep.subr.bf16.mxu0 0
    %732 = vmatpush1.bf16.msra.mxu0 0
    %733 = vmatprep.subr.bf16.mxu0 0
    %734 = vmatpush1.bf16.msra.mxu0 0
    %735 = vmatprep.subr.bf16.mxu0 0
    %736 = vmatpush1.bf16.msra.mxu0 0
    %737 = vmatprep.subr.bf16.mxu0 0
    %738 = vmatpush1.bf16.msra.mxu0 0
    %739 = vmatprep.subr.bf16.mxu0 0
    %740 = vmatpush1.bf16.msra.mxu0 0
    %741 = vmatprep.subr.bf16.mxu0 0
    %742 = vmatpush1.bf16.msra.mxu0 0
    %743 = vmatprep.subr.bf16.mxu0 0
    %744 = vmatpush1.bf16.msra.mxu0 0
    %745 = vmatprep.subr.bf16.mxu0 0
    %746 = vmatpush1.bf16.msra.mxu0 0
    %747 = vmatprep.subr.bf16.mxu0 0
    %748 = vmatpush1.bf16.msra.mxu0 0
    %749 = vmatprep.mubr.bf16.mxu0 0
    %750 = vmatmul.mubr.bf16.gmra.mrb[0].mxu0 %v365
    %v751 = vpop.f32.mrb[0].mxu0
    %v752 = vadd.f32 0.0, %v751
    %v753 = vpop.f32.mrb[0].mxu0
    %v754 = vadd.f32 0.0, %v753
    %v755 = vpop.f32.mrb[0].mxu0
    %v756 = vadd.f32 0.0, %v755
    %v757 = vpop.f32.mrb[0].mxu0
    %v758 = vadd.f32 0.0, %v757
    %759 = vmatprep.mubr.bf16.mxu0 0
    %760 = vmatmul.mubr.bf16.gmra.mrb[0].mxu0 %v368
    %v761 = vpop.f32.mrb[0].mxu0
    %v762 = vadd.f32 0.0, %v761
    %v763 = vpop.f32.mrb[0].mxu0
    %v764 = vadd.f32 0.0, %v763
    %v765 = vpop.f32.mrb[0].mxu0
    %v766 = vadd.f32 0.0, %v765
    %v767 = vpop.f32.mrb[0].mxu0
    %v768 = vadd.f32 0.0, %v767
    %769 = vmatprep.mubr.bf16.mxu0 0
    %770 = vmatmul.mubr.bf16.gmra.mrb[0].mxu0 %v371
    %v771 = vpop.f32.mrb[0].mxu0
    %v772 = vadd.f32 0.0, %v771
    %v773 = vpop.f32.mrb[0].mxu0
    %v774 = vadd.f32 0.0, %v773
    %v775 = vpop.f32.mrb[0].mxu0
    %v776 = vadd.f32 0.0, %v775
    %v777 = vpop.f32.mrb[0].mxu0
    %v778 = vadd.f32 0.0, %v777
    %779 = vmatprep.mubr.bf16.mxu0 0
    %780 = vmatmul.mubr.bf16.gmra.mrb[0].mxu0 %v374
    %v781 = vpop.f32.mrb[0].mxu0
    %v782 = vadd.f32 0.0, %v781
    %v783 = vpop.f32.mrb[0].mxu0
    %v784 = vadd.f32 0.0, %v783
    %v785 = vpop.f32.mrb[0].mxu0
    %v786 = vadd.f32 0.0, %v785
    %v787 = vpop.f32.mrb[0].mxu0
    %v788 = vadd.f32 0.0, %v787
    %789 = vdwg.mxu0
    %790 = vmatprep.subr.bf16.mxu0 %v294
    %791 = vmatpush1.bf16.msra.mxu0 %v293
    %792 = vmatprep.subr.bf16.mxu0 %v310
    %793 = vmatpush1.bf16.msra.mxu0 %v309
    %794 = vmatprep.subr.bf16.mxu0 %v411
    %795 = vmatpush1.bf16.msra.mxu0 %v408
    %796 = vmatprep.subr.bf16.mxu0 0
    %797 = vmatpush1.bf16.msra.mxu0 0
    %798 = vmatprep.subr.bf16.mxu0 0
    %799 = vmatpush1.bf16.msra.mxu0 0
    %800 = vmatprep.subr.bf16.mxu0 0
    %801 = vmatpush1.bf16.msra.mxu0 0
    %802 = vmatprep.subr.bf16.mxu0 0
    %803 = vmatpush1.bf16.msra.mxu0 0
    %804 = vmatprep.subr.bf16.mxu0 0
    %805 = vmatpush1.bf16.msra.mxu0 0
    %806 = vmatprep.subr.bf16.mxu0 0
    %807 = vmatpush1.bf16.msra.mxu0 0
    %808 = vmatprep.subr.bf16.mxu0 0
    %809 = vmatpush1.bf16.msra.mxu0 0
    %810 = vmatprep.subr.bf16.mxu0 0
    %811 = vmatpush1.bf16.msra.mxu0 0
    %812 = vmatprep.subr.bf16.mxu0 0
    %813 = vmatpush1.bf16.msra.mxu0 0
    %814 = vmatprep.subr.bf16.mxu0 0
    %815 = vmatpush1.bf16.msra.mxu0 0
    %816 = vmatprep.subr.bf16.mxu0 0
    %817 = vmatpush1.bf16.msra.mxu0 0
    %818 = vmatprep.subr.bf16.mxu0 0
    %819 = vmatpush1.bf16.msra.mxu0 0
    %820 = vmatprep.subr.bf16.mxu0 0
    %821 = vmatpush1.bf16.msra.mxu0 0
    %822 = vmatprep.mubr.bf16.mxu0 0
    %823 = vmatmul.mubr.bf16.gmra.mrb[0].mxu0 %v365
    %v824 = vpop.f32.mrb[0].mxu0
    %v825 = vadd.f32 0.0, %v824
    %v826 = vpop.f32.mrb[0].mxu0
    %v827 = vadd.f32 0.0, %v826
    %v828 = vpop.f32.mrb[0].mxu0
    %v829 = vadd.f32 0.0, %v828
    %v830 = vpop.f32.mrb[0].mxu0
    %v831 = vadd.f32 0.0, %v830
    %832 = vmatprep.mubr.bf16.mxu0 0
    %833 = vmatmul.mubr.bf16.gmra.mrb[0].mxu0 %v368
    %v834 = vpop.f32.mrb[0].mxu0
    %v835 = vadd.f32 0.0, %v834
    %v836 = vpop.f32.mrb[0].mxu0
    %v837 = vadd.f32 0.0, %v836
    %v838 = vpop.f32.mrb[0].mxu0
    %v839 = vadd.f32 0.0, %v838
    %v840 = vpop.f32.mrb[0].mxu0
    %v841 = vadd.f32 0.0, %v840
    %842 = vmatprep.mubr.bf16.mxu0 0
    %843 = vmatmul.mubr.bf16.gmra.mrb[0].mxu0 %v371
    %v844 = vpop.f32.mrb[0].mxu0
    %v845 = vadd.f32 0.0, %v844
    %v846 = vpop.f32.mrb[0].mxu0
    %v847 = vadd.f32 0.0, %v846
    %v848 = vpop.f32.mrb[0].mxu0
    %v849 = vadd.f32 0.0, %v848
    %v850 = vpop.f32.mrb[0].mxu0
    %v851 = vadd.f32 0.0, %v850
    %852 = vmatprep.mubr.bf16.mxu0 0
    %853 = vmatmul.mubr.bf16.gmra.mrb[0].mxu0 %v374
    %v854 = vpop.f32.mrb[0].mxu0
    %v855 = vadd.f32 0.0, %v854
    %v856 = vpop.f32.mrb[0].mxu0
    %v857 = vadd.f32 0.0, %v856
    %v858 = vpop.f32.mrb[0].mxu0
    %v859 = vadd.f32 0.0, %v858
    %v860 = vpop.f32.mrb[0].mxu0
    %v861 = vadd.f32 0.0, %v860
    %862 = vdwg.mxu0
    %863 = vmatprep.subr.bf16.mxu0 %v296
    %864 = vmatpush1.bf16.msra.mxu0 %v295
    %865 = vmatprep.subr.bf16.mxu0 %v312
    %866 = vmatpush1.bf16.msra.mxu0 %v311
    %867 = vmatprep.subr.bf16.mxu0 %v417
    %868 = vmatpush1.bf16.msra.mxu0 %v414
    %869 = vmatprep.subr.bf16.mxu0 0
    %870 = vmatpush1.bf16.msra.mxu0 0
    %871 = vmatprep.subr.bf16.mxu0 0
    %872 = vmatpush1.bf16.msra.mxu0 0
    %873 = vmatprep.subr.bf16.mxu0 0
    %874 = vmatpush1.bf16.msra.mxu0 0
    %875 = vmatprep.subr.bf16.mxu0 0
    %876 = vmatpush1.bf16.msra.mxu0 0
    %877 = vmatprep.subr.bf16.mxu0 0
    %878 = vmatpush1.bf16.msra.mxu0 0
    %879 = vmatprep.subr.bf16.mxu0 0
    %880 = vmatpush1.bf16.msra.mxu0 0
    %881 = vmatprep.subr.bf16.mxu0 0
    %882 = vmatpush1.bf16.msra.mxu0 0
    %883 = vmatprep.subr.bf16.mxu0 0
    %884 = vmatpush1.bf16.msra.mxu0 0
    %885 = vmatprep.subr.bf16.mxu0 0
    %886 = vmatpush1.bf16.msra.mxu0 0
    %887 = vmatprep.subr.bf16.mxu0 0
    %888 = vmatpush1.bf16.msra.mxu0 0
    %889 = vmatprep.subr.bf16.mxu0 0
    %890 = vmatpush1.bf16.msra.mxu0 0
    %891 = vmatprep.subr.bf16.mxu0 0
    %892 = vmatpush1.bf16.msra.mxu0 0
    %893 = vmatprep.subr.bf16.mxu0 0
    %894 = vmatpush1.bf16.msra.mxu0 0
    %895 = vmatprep.mubr.bf16.mxu0 0
    %896 = vmatmul.mubr.bf16.gmra.mrb[0].mxu0 %v365
    %v897 = vpop.f32.mrb[0].mxu0
    %v898 = vadd.f32 0.0, %v897
    %v899 = vpop.f32.mrb[0].mxu0
    %v900 = vadd.f32 0.0, %v899
    %v901 = vpop.f32.mrb[0].mxu0
    %v902 = vadd.f32 0.0, %v901
    %v903 = vpop.f32.mrb[0].mxu0
    %v904 = vadd.f32 0.0, %v903
    %905 = vmatprep.mubr.bf16.mxu0 0
    %906 = vmatmul.mubr.bf16.gmra.mrb[0].mxu0 %v368
    %v907 = vpop.f32.mrb[0].mxu0
    %v908 = vadd.f32 0.0, %v907
    %v909 = vpop.f32.mrb[0].mxu0
    %v910 = vadd.f32 0.0, %v909
    %v911 = vpop.f32.mrb[0].mxu0
    %v912 = vadd.f32 0.0, %v911
    %v913 = vpop.f32.mrb[0].mxu0
    %v914 = vadd.f32 0.0, %v913
    %915 = vmatprep.mubr.bf16.mxu0 0
    %916 = vmatmul.mubr.bf16.gmra.mrb[0].mxu0 %v371
    %v917 = vpop.f32.mrb[0].mxu0
    %v918 = vadd.f32 0.0, %v917
    %v919 = vpop.f32.mrb[0].mxu0
    %v920 = vadd.f32 0.0, %v919
    %v921 = vpop.f32.mrb[0].mxu0
    %v922 = vadd.f32 0.0, %v921
    %v923 = vpop.f32.mrb[0].mxu0
    %v924 = vadd.f32 0.0, %v923
    %925 = vmatprep.mubr.bf16.mxu0 0
    %926 = vmatmul.mubr.bf16.gmra.mrb[0].mxu0 %v374
    %v927 = vpop.f32.mrb[0].mxu0
    %v928 = vadd.f32 0.0, %v927
    %v929 = vpop.f32.mrb[0].mxu0
    %v930 = vadd.f32 0.0, %v929
    %v931 = vpop.f32.mrb[0].mxu0
    %v932 = vadd.f32 0.0, %v931
    %v933 = vpop.f32.mrb[0].mxu0
    %v934 = vadd.f32 0.0, %v933
    %935 = vdwg.mxu0
    %936 = vmatprep.subr.bf16.mxu0 %v298
    %937 = vmatpush1.bf16.msra.mxu0 %v297
    %938 = vmatprep.subr.bf16.mxu0 %v314
    %939 = vmatpush1.bf16.msra.mxu0 %v313
    %940 = vmatprep.subr.bf16.mxu0 %v423
    %941 = vmatpush1.bf16.msra.mxu0 %v420
    %942 = vmatprep.subr.bf16.mxu0 0
    %943 = vmatpush1.bf16.msra.mxu0 0
    %944 = vmatprep.subr.bf16.mxu0 0
    %945 = vmatpush1.bf16.msra.mxu0 0
    %946 = vmatprep.subr.bf16.mxu0 0
    %947 = vmatpush1.bf16.msra.mxu0 0
    %948 = vmatprep.subr.bf16.mxu0 0
    %949 = vmatpush1.bf16.msra.mxu0 0
    %950 = vmatprep.subr.bf16.mxu0 0
    %951 = vmatpush1.bf16.msra.mxu0 0
    %952 = vmatprep.subr.bf16.mxu0 0
    %953 = vmatpush1.bf16.msra.mxu0 0
    %954 = vmatprep.subr.bf16.mxu0 0
    %955 = vmatpush1.bf16.msra.mxu0 0
    %956 = vmatprep.subr.bf16.mxu0 0
    %957 = vmatpush1.bf16.msra.mxu0 0
    %958 = vmatprep.subr.bf16.mxu0 0
    %959 = vmatpush1.bf16.msra.mxu0 0
    %960 = vmatprep.subr.bf16.mxu0 0
    %961 = vmatpush1.bf16.msra.mxu0 0
    %962 = vmatprep.subr.bf16.mxu0 0
    %963 = vmatpush1.bf16.msra.mxu0 0
    %964 = vmatprep.subr.bf16.mxu0 0
    %965 = vmatpush1.bf16.msra.mxu0 0
    %966 = vmatprep.subr.bf16.mxu0 0
    %967 = vmatpush1.bf16.msra.mxu0 0
    %968 = vmatprep.mubr.bf16.mxu0 0
    %969 = vmatmul.mubr.bf16.gmra.mrb[0].mxu0 %v365
    %v970 = vpop.f32.mrb[0].mxu0
    %v971 = vadd.f32 0.0, %v970
    %v972 = vpop.f32.mrb[0].mxu0
    %v973 = vadd.f32 0.0, %v972
    %v974 = vpop.f32.mrb[0].mxu0
    %v975 = vadd.f32 0.0, %v974
    %v976 = vpop.f32.mrb[0].mxu0
    %v977 = vadd.f32 0.0, %v976
    %978 = vmatprep.mubr.bf16.mxu0 0
    %979 = vmatmul.mubr.bf16.gmra.mrb[0].mxu0 %v368
    %v980 = vpop.f32.mrb[0].mxu0
    %v981 = vadd.f32 0.0, %v980
    %v982 = vpop.f32.mrb[0].mxu0
    %v983 = vadd.f32 0.0, %v982
    %v984 = vpop.f32.mrb[0].mxu0
    %v985 = vadd.f32 0.0, %v984
    %v986 = vpop.f32.mrb[0].mxu0
    %v987 = vadd.f32 0.0, %v986
    %988 = vmatprep.mubr.bf16.mxu0 0
    %989 = vmatmul.mubr.bf16.gmra.mrb[0].mxu0 %v371
    %v990 = vpop.f32.mrb[0].mxu0
    %v991 = vadd.f32 0.0, %v990
    %v992 = vpop.f32.mrb[0].mxu0
    %v993 = vadd.f32 0.0, %v992
    %v994 = vpop.f32.mrb[0].mxu0
    %v995 = vadd.f32 0.0, %v994
    %v996 = vpop.f32.mrb[0].mxu0
    %v997 = vadd.f32 0.0, %v996
    %998 = vmatprep.mubr.bf16.mxu0 0
    %999 = vmatmul.mubr.bf16.gmra.mrb[0].mxu0 %v374
    %v1000 = vpop.f32.mrb[0].mxu0
    %v1001 = vadd.f32 0.0, %v1000
    %v1002 = vpop.f32.mrb[0].mxu0
    %v1003 = vadd.f32 0.0, %v1002
    %v1004 = vpop.f32.mrb[0].mxu0
    %v1005 = vadd.f32 0.0, %v1004
    %v1006 = vpop.f32.mrb[0].mxu0
    %v1007 = vadd.f32 0.0, %v1006
    %1008 = vdwg.mxu0
    %v1017 = vunpack.c.l.b16 %v47
    %v1018 = vunpack.c.l.b16 %v48
    %v1019 = vunpack.c.l.b16 %v49
    %v1020 = vunpack.c.l.b16 %v50
    %v1021 = vunpack.c.l.b16 %v51
    %v1022 = vunpack.c.l.b16 %v52
    %v1023 = vunpack.c.l.b16 %v53
    %v1024 = vunpack.c.l.b16 %v54
    %v1025 = vpack.c.b16 %v1018, %v1017
    %v1026 = vpack.c.b16 %v1020, %v1019
    %v1027 = vpack.c.b16 %v1022, %v1021
    %v1028 = vpack.c.b16 %v1024, %v1023
    %v1069 = vunpack.c.l.b16 %v55
    %v1070 = vunpack.c.h.b16 %v55
    %v1071 = vunpack.c.l.b16 %v56
    %v1072 = vunpack.c.h.b16 %v56
    %v1073 = vunpack.c.l.b16 %v57
    %v1074 = vunpack.c.h.b16 %v57
    %v1075 = vunpack.c.l.b16 %v58
    %v1076 = vunpack.c.h.b16 %v58
    %v1077 = vunpack.c.l.b16 %v59
    %v1078 = vunpack.c.h.b16 %v59
    %v1079 = vunpack.c.l.b16 %v60
    %v1080 = vunpack.c.h.b16 %v60
    %v1081 = vunpack.c.l.b16 %v61
    %v1082 = vunpack.c.h.b16 %v61
    %v1083 = vunpack.c.l.b16 %v62
    %v1084 = vunpack.c.h.b16 %v62
    %v1085 = vunpack.c.l.b16 %v63
    %v1086 = vunpack.c.h.b16 %v63
    %v1087 = vunpack.c.l.b16 %v64
    %v1088 = vunpack.c.h.b16 %v64
    %v1089 = vunpack.c.l.b16 %v65
    %v1090 = vunpack.c.h.b16 %v65
    %v1091 = vunpack.c.l.b16 %v66
    %v1092 = vunpack.c.h.b16 %v66
    %v1093 = vunpack.c.l.b16 %v67
    %v1094 = vunpack.c.h.b16 %v67
    %v1095 = vunpack.c.l.b16 %v68
    %v1096 = vunpack.c.h.b16 %v68
    %v1097 = vunpack.c.l.b16 %v69
    %v1098 = vunpack.c.h.b16 %v69
    %v1099 = vunpack.c.l.b16 %v70
    %v1100 = vunpack.c.h.b16 %v70
    %v1101 = vunpack.c.l.b16 %v71
    %v1102 = vunpack.c.h.b16 %v71
    %v1103 = vunpack.c.l.b16 %v72
    %v1104 = vunpack.c.h.b16 %v72
    %v1105 = vunpack.c.l.b16 %v73
    %v1106 = vunpack.c.h.b16 %v73
    %v1107 = vunpack.c.l.b16 %v74
    %v1108 = vunpack.c.h.b16 %v74
    %v1109 = vunpack.c.l.b16 %v75
    %v1110 = vunpack.c.h.b16 %v75
    %v1111 = vunpack.c.l.b16 %v76
    %v1112 = vunpack.c.h.b16 %v76
    %v1113 = vunpack.c.l.b16 %v77
    %v1114 = vunpack.c.h.b16 %v77
    %v1115 = vunpack.c.l.b16 %v78
    %v1116 = vunpack.c.h.b16 %v78
    %v1117 = vunpack.c.l.b16 %v79
    %v1118 = vunpack.c.h.b16 %v79
    %v1119 = vunpack.c.l.b16 %v80
    %v1120 = vunpack.c.h.b16 %v80
    %v1121 = vunpack.c.l.b16 %v81
    %v1122 = vunpack.c.h.b16 %v81
    %v1123 = vunpack.c.l.b16 %v82
    %v1124 = vunpack.c.h.b16 %v82
    %v1125 = vunpack.c.l.b16 %v83
    %v1126 = vunpack.c.h.b16 %v83
    %v1127 = vunpack.c.l.b16 %v84
    %v1128 = vunpack.c.h.b16 %v84
    %v1129 = vunpack.c.l.b16 %v85
    %v1130 = vunpack.c.h.b16 %v85
    %v1131 = vunpack.c.l.b16 %v86
    %v1132 = vunpack.c.h.b16 %v86
    %v1133 = vunpack.c.l.b16 %v87
    %v1134 = vunpack.c.h.b16 %v87
    %v1135 = vunpack.c.l.b16 %v88
    %v1136 = vunpack.c.h.b16 %v88
    %v1137 = vunpack.c.l.b16 %v89
    %v1138 = vunpack.c.h.b16 %v89
    %v1139 = vunpack.c.l.b16 %v90
    %v1140 = vunpack.c.h.b16 %v90
    %v1141 = vunpack.c.l.b16 %v91
    %v1142 = vunpack.c.h.b16 %v91
    %v1143 = vunpack.c.l.b16 %v92
    %v1144 = vunpack.c.h.b16 %v92
    %v1145 = vunpack.c.l.b16 %v93
    %v1146 = vunpack.c.h.b16 %v93
    %v1147 = vunpack.c.l.b16 %v94
    %v1148 = vunpack.c.h.b16 %v94
    %v1149 = vpack.c.b16 %v1085, %v1069
    %v1150 = vpack.c.b16 %v1086, %v1070
    %v1151 = vpack.c.b16 %v1087, %v1071
    %v1152 = vpack.c.b16 %v1088, %v1072
    %v1153 = vpack.c.b16 %v1089, %v1073
    %v1154 = vpack.c.b16 %v1090, %v1074
    %v1155 = vpack.c.b16 %v1091, %v1075
    %v1156 = vpack.c.b16 %v1092, %v1076
    %v1157 = vpack.c.b16 %v1093, %v1077
    %v1158 = vpack.c.b16 %v1094, %v1078
    %v1159 = vpack.c.b16 %v1095, %v1079
    %v1160 = vpack.c.b16 %v1096, %v1080
    %v1161 = vpack.c.b16 %v1097, %v1081
    %v1162 = vpack.c.b16 %v1098, %v1082
    %v1163 = vpack.c.b16 %v1099, %v1083
    %v1164 = vpack.c.b16 %v1100, %v1084
    %v1165 = vpack.c.b16 %v1117, %v1101
    %v1166 = vpack.c.b16 %v1118, %v1102
    %v1167 = vpack.c.b16 %v1119, %v1103
    %v1168 = vpack.c.b16 %v1120, %v1104
    %v1169 = vpack.c.b16 %v1121, %v1105
    %v1170 = vpack.c.b16 %v1122, %v1106
    %v1171 = vpack.c.b16 %v1123, %v1107
    %v1172 = vpack.c.b16 %v1124, %v1108
    %v1173 = vpack.c.b16 %v1125, %v1109
    %v1174 = vpack.c.b16 %v1126, %v1110
    %v1175 = vpack.c.b16 %v1127, %v1111
    %v1176 = vpack.c.b16 %v1128, %v1112
    %v1177 = vpack.c.b16 %v1129, %v1113
    %v1178 = vpack.c.b16 %v1130, %v1114
    %v1179 = vpack.c.b16 %v1131, %v1115
    %v1180 = vpack.c.b16 %v1132, %v1116
    %v1181 = vpack.c.b16 %v1133, %v1133
    %v1182 = vpack.c.b16 %v1134, %v1134
    %v1183 = vpack.c.b16 %v1135, %v1135
    %v1184 = vpack.c.b16 %v1136, %v1136
    %v1185 = vpack.c.b16 %v1137, %v1137
    %v1186 = vpack.c.b16 %v1138, %v1138
    %v1187 = vpack.c.b16 %v1139, %v1139
    %v1188 = vpack.c.b16 %v1140, %v1140
    %v1189 = vpack.c.b16 %v1141, %v1141
    %v1190 = vpack.c.b16 %v1142, %v1142
    %v1191 = vpack.c.b16 %v1143, %v1143
    %v1192 = vpack.c.b16 %v1144, %v1144
    %v1193 = vpack.c.b16 %v1145, %v1145
    %v1194 = vpack.c.b16 %v1146, %v1146
    %v1195 = vpack.c.b16 %v1147, %v1147
    %v1196 = vpack.c.b16 %v1148, %v1148
    %v1230 = vsel %vm363, %v1025, 0
    %v1233 = vsel %vm363, %v1026, 0
    %v1236 = vsel %vm363, %v1027, 0
    %v1239 = vsel %vm363, %v1028, 0
    %v1242 = vsel %vm376, %v1181, 0
    %v1245 = vsel %vm376, %v1182, 0
    %v1248 = vsel %vm376, %v1183, 0
    %v1251 = vsel %vm376, %v1184, 0
    %v1254 = vsel %vm376, %v1185, 0
    %v1257 = vsel %vm376, %v1186, 0
    %v1260 = vsel %vm376, %v1187, 0
    %v1263 = vsel %vm376, %v1188, 0
    %v1266 = vsel %vm376, %v1189, 0
    %v1269 = vsel %vm376, %v1190, 0
    %v1272 = vsel %vm376, %v1191, 0
    %v1275 = vsel %vm376, %v1192, 0
    %v1278 = vsel %vm376, %v1193, 0
    %v1281 = vsel %vm376, %v1194, 0
    %v1284 = vsel %vm376, %v1195, 0
    %v1287 = vsel %vm376, %v1196, 0
    %1289 = vmatprep.subr.bf16.mxu0 %v1150
    %1290 = vmatpush1.bf16.msra.mxu0 %v1149
    %1291 = vmatprep.subr.bf16.mxu0 %v1166
    %1292 = vmatpush1.bf16.msra.mxu0 %v1165
    %1293 = vmatprep.subr.bf16.mxu0 %v1245
    %1294 = vmatpush1.bf16.msra.mxu0 %v1242
    %1295 = vmatprep.subr.bf16.mxu0 0
    %1296 = vmatpush1.bf16.msra.mxu0 0
    %1297 = vmatprep.subr.bf16.mxu0 0
    %1298 = vmatpush1.bf16.msra.mxu0 0
    %1299 = vmatprep.subr.bf16.mxu0 0
    %1300 = vmatpush1.bf16.msra.mxu0 0
    %1301 = vmatprep.subr.bf16.mxu0 0
    %1302 = vmatpush1.bf16.msra.mxu0 0
    %1303 = vmatprep.subr.bf16.mxu0 0
    %1304 = vmatpush1.bf16.msra.mxu0 0
    %1305 = vmatprep.subr.bf16.mxu0 0
    %1306 = vmatpush1.bf16.msra.mxu0 0
    %1307 = vmatprep.subr.bf16.mxu0 0
    %1308 = vmatpush1.bf16.msra.mxu0 0
    %1309 = vmatprep.subr.bf16.mxu0 0
    %1310 = vmatpush1.bf16.msra.mxu0 0
    %1311 = vmatprep.subr.bf16.mxu0 0
    %1312 = vmatpush1.bf16.msra.mxu0 0
    %1313 = vmatprep.subr.bf16.mxu0 0
    %1314 = vmatpush1.bf16.msra.mxu0 0
    %1315 = vmatprep.subr.bf16.mxu0 0
    %1316 = vmatpush1.bf16.msra.mxu0 0
    %1317 = vmatprep.subr.bf16.mxu0 0
    %1318 = vmatpush1.bf16.msra.mxu0 0
    %1319 = vmatprep.subr.bf16.mxu0 0
    %1320 = vmatpush1.bf16.msra.mxu0 0
    %1321 = vmatprep.mubr.bf16.mxu0 0
    %1322 = vmatmul.mubr.bf16.gmra.mrb[0].mxu0 %v1230
    %v1323 = vpop.f32.mrb[0].mxu0
    %v1324 = vadd.f32 %v460, %v1323
    %v1325 = vpop.f32.mrb[0].mxu0
    %v1326 = vadd.f32 %v462, %v1325
    %v1327 = vpop.f32.mrb[0].mxu0
    %v1328 = vadd.f32 %v464, %v1327
    %v1329 = vpop.f32.mrb[0].mxu0
    %v1330 = vadd.f32 %v466, %v1329
    %1331 = vmatprep.mubr.bf16.mxu0 0
    %1332 = vmatmul.mubr.bf16.gmra.mrb[0].mxu0 %v1233
    %v1333 = vpop.f32.mrb[0].mxu0
    %v1334 = vadd.f32 %v470, %v1333
    %v1335 = vpop.f32.mrb[0].mxu0
    %v1336 = vadd.f32 %v472, %v1335
    %v1337 = vpop.f32.mrb[0].mxu0
    %v1338 = vadd.f32 %v474, %v1337
    %v1339 = vpop.f32.mrb[0].mxu0
    %v1340 = vadd.f32 %v476, %v1339
    %1341 = vmatprep.mubr.bf16.mxu0 0
    %1342 = vmatmul.mubr.bf16.gmra.mrb[0].mxu0 %v1236
    %v1343 = vpop.f32.mrb[0].mxu0
    %v1344 = vadd.f32 %v480, %v1343
    %v1345 = vpop.f32.mrb[0].mxu0
    %v1346 = vadd.f32 %v482, %v1345
    %v1347 = vpop.f32.mrb[0].mxu0
    %v1348 = vadd.f32 %v484, %v1347
    %v1349 = vpop.f32.mrb[0].mxu0
    %v1350 = vadd.f32 %v486, %v1349
    %1351 = vmatprep.mubr.bf16.mxu0 0
    %1352 = vmatmul.mubr.bf16.gmra.mrb[0].mxu0 %v1239
    %v1353 = vpop.f32.mrb[0].mxu0
    %v1354 = vadd.f32 %v490, %v1353
    %v1355 = vpop.f32.mrb[0].mxu0
    %v1356 = vadd.f32 %v492, %v1355
    %v1357 = vpop.f32.mrb[0].mxu0
    %v1358 = vadd.f32 %v494, %v1357
    %v1359 = vpop.f32.mrb[0].mxu0
    %v1360 = vadd.f32 %v496, %v1359
    %1361 = vdwg.mxu0
    %1362 = vmatprep.subr.bf16.mxu0 %v1152
    %1363 = vmatpush1.bf16.msra.mxu0 %v1151
    %1364 = vmatprep.subr.bf16.mxu0 %v1168
    %1365 = vmatpush1.bf16.msra.mxu0 %v1167
    %1366 = vmatprep.subr.bf16.mxu0 %v1251
    %1367 = vmatpush1.bf16.msra.mxu0 %v1248
    %1368 = vmatprep.subr.bf16.mxu0 0
    %1369 = vmatpush1.bf16.msra.mxu0 0
    %1370 = vmatprep.subr.bf16.mxu0 0
    %1371 = vmatpush1.bf16.msra.mxu0 0
    %1372 = vmatprep.subr.bf16.mxu0 0
    %1373 = vmatpush1.bf16.msra.mxu0 0
    %1374 = vmatprep.subr.bf16.mxu0 0
    %1375 = vmatpush1.bf16.msra.mxu0 0
    %1376 = vmatprep.subr.bf16.mxu0 0
    %1377 = vmatpush1.bf16.msra.mxu0 0
    %1378 = vmatprep.subr.bf16.mxu0 0
    %1379 = vmatpush1.bf16.msra.mxu0 0
    %1380 = vmatprep.subr.bf16.mxu0 0
    %1381 = vmatpush1.bf16.msra.mxu0 0
    %1382 = vmatprep.subr.bf16.mxu0 0
    %1383 = vmatpush1.bf16.msra.mxu0 0
    %1384 = vmatprep.subr.bf16.mxu0 0
    %1385 = vmatpush1.bf16.msra.mxu0 0
    %1386 = vmatprep.subr.bf16.mxu0 0
    %1387 = vmatpush1.bf16.msra.mxu0 0
    %1388 = vmatprep.subr.bf16.mxu0 0
    %1389 = vmatpush1.bf16.msra.mxu0 0
    %1390 = vmatprep.subr.bf16.mxu0 0
    %1391 = vmatpush1.bf16.msra.mxu0 0
    %1392 = vmatprep.subr.bf16.mxu0 0
    %1393 = vmatpush1.bf16.msra.mxu0 0
    %1394 = vmatprep.mubr.bf16.mxu0 0
    %1395 = vmatmul.mubr.bf16.gmra.mrb[0].mxu0 %v1230
    %v1396 = vpop.f32.mrb[0].mxu0
    %v1397 = vadd.f32 %v533, %v1396
    %v1398 = vpop.f32.mrb[0].mxu0
    %v1399 = vadd.f32 %v535, %v1398
    %v1400 = vpop.f32.mrb[0].mxu0
    %v1401 = vadd.f32 %v537, %v1400
    %v1402 = vpop.f32.mrb[0].mxu0
    %v1403 = vadd.f32 %v539, %v1402
    %1404 = vmatprep.mubr.bf16.mxu0 0
    %1405 = vmatmul.mubr.bf16.gmra.mrb[0].mxu0 %v1233
    %v1406 = vpop.f32.mrb[0].mxu0
    %v1407 = vadd.f32 %v543, %v1406
    %v1408 = vpop.f32.mrb[0].mxu0
    %v1409 = vadd.f32 %v545, %v1408
    %v1410 = vpop.f32.mrb[0].mxu0
    %v1411 = vadd.f32 %v547, %v1410
    %v1412 = vpop.f32.mrb[0].mxu0
    %v1413 = vadd.f32 %v549, %v1412
    %1414 = vmatprep.mubr.bf16.mxu0 0
    %1415 = vmatmul.mubr.bf16.gmra.mrb[0].mxu0 %v1236
    %v1416 = vpop.f32.mrb[0].mxu0
    %v1417 = vadd.f32 %v553, %v1416
    %v1418 = vpop.f32.mrb[0].mxu0
    %v1419 = vadd.f32 %v555, %v1418
    %v1420 = vpop.f32.mrb[0].mxu0
    %v1421 = vadd.f32 %v557, %v1420
    %v1422 = vpop.f32.mrb[0].mxu0
    %v1423 = vadd.f32 %v559, %v1422
    %1424 = vmatprep.mubr.bf16.mxu0 0
    %1425 = vmatmul.mubr.bf16.gmra.mrb[0].mxu0 %v1239
    %v1426 = vpop.f32.mrb[0].mxu0
    %v1427 = vadd.f32 %v563, %v1426
    %v1428 = vpop.f32.mrb[0].mxu0
    %v1429 = vadd.f32 %v565, %v1428
    %v1430 = vpop.f32.mrb[0].mxu0
    %v1431 = vadd.f32 %v567, %v1430
    %v1432 = vpop.f32.mrb[0].mxu0
    %v1433 = vadd.f32 %v569, %v1432
    %1434 = vdwg.mxu0
    %1435 = vmatprep.subr.bf16.mxu0 %v1154
    %1436 = vmatpush1.bf16.msra.mxu0 %v1153
    %1437 = vmatprep.subr.bf16.mxu0 %v1170
    %1438 = vmatpush1.bf16.msra.mxu0 %v1169
    %1439 = vmatprep.subr.bf16.mxu0 %v1257
    %1440 = vmatpush1.bf16.msra.mxu0 %v1254
    %1441 = vmatprep.subr.bf16.mxu0 0
    %1442 = vmatpush1.bf16.msra.mxu0 0
    %1443 = vmatprep.subr.bf16.mxu0 0
    %1444 = vmatpush1.bf16.msra.mxu0 0
    %1445 = vmatprep.subr.bf16.mxu0 0
    %1446 = vmatpush1.bf16.msra.mxu0 0
    %1447 = vmatprep.subr.bf16.mxu0 0
    %1448 = vmatpush1.bf16.msra.mxu0 0
    %1449 = vmatprep.subr.bf16.mxu0 0
    %1450 = vmatpush1.bf16.msra.mxu0 0
    %1451 = vmatprep.subr.bf16.mxu0 0
    %1452 = vmatpush1.bf16.msra.mxu0 0
    %1453 = vmatprep.subr.bf16.mxu0 0
    %1454 = vmatpush1.bf16.msra.mxu0 0
    %1455 = vmatprep.subr.bf16.mxu0 0
    %1456 = vmatpush1.bf16.msra.mxu0 0
    %1457 = vmatprep.subr.bf16.mxu0 0
    %1458 = vmatpush1.bf16.msra.mxu0 0
    %1459 = vmatprep.subr.bf16.mxu0 0
    %1460 = vmatpush1.bf16.msra.mxu0 0
    %1461 = vmatprep.subr.bf16.mxu0 0
    %1462 = vmatpush1.bf16.msra.mxu0 0
    %1463 = vmatprep.subr.bf16.mxu0 0
    %1464 = vmatpush1.bf16.msra.mxu0 0
    %1465 = vmatprep.subr.bf16.mxu0 0
    %1466 = vmatpush1.bf16.msra.mxu0 0
    %1467 = vmatprep.mubr.bf16.mxu0 0
    %1468 = vmatmul.mubr.bf16.gmra.mrb[0].mxu0 %v1230
    %v1469 = vpop.f32.mrb[0].mxu0
    %v1470 = vadd.f32 %v606, %v1469
    %v1471 = vpop.f32.mrb[0].mxu0
    %v1472 = vadd.f32 %v608, %v1471
    %v1473 = vpop.f32.mrb[0].mxu0
    %v1474 = vadd.f32 %v610, %v1473
    %v1475 = vpop.f32.mrb[0].mxu0
    %v1476 = vadd.f32 %v612, %v1475
    %1477 = vmatprep.mubr.bf16.mxu0 0
    %1478 = vmatmul.mubr.bf16.gmra.mrb[0].mxu0 %v1233
    %v1479 = vpop.f32.mrb[0].mxu0
    %v1480 = vadd.f32 %v616, %v1479
    %v1481 = vpop.f32.mrb[0].mxu0
    %v1482 = vadd.f32 %v618, %v1481
    %v1483 = vpop.f32.mrb[0].mxu0
    %v1484 = vadd.f32 %v620, %v1483
    %v1485 = vpop.f32.mrb[0].mxu0
    %v1486 = vadd.f32 %v622, %v1485
    %1487 = vmatprep.mubr.bf16.mxu0 0
    %1488 = vmatmul.mubr.bf16.gmra.mrb[0].mxu0 %v1236
    %v1489 = vpop.f32.mrb[0].mxu0
    %v1490 = vadd.f32 %v626, %v1489
    %v1491 = vpop.f32.mrb[0].mxu0
    %v1492 = vadd.f32 %v628, %v1491
    %v1493 = vpop.f32.mrb[0].mxu0
    %v1494 = vadd.f32 %v630, %v1493
    %v1495 = vpop.f32.mrb[0].mxu0
    %v1496 = vadd.f32 %v632, %v1495
    %1497 = vmatprep.mubr.bf16.mxu0 0
    %1498 = vmatmul.mubr.bf16.gmra.mrb[0].mxu0 %v1239
    %v1499 = vpop.f32.mrb[0].mxu0
    %v1500 = vadd.f32 %v636, %v1499
    %v1501 = vpop.f32.mrb[0].mxu0
    %v1502 = vadd.f32 %v638, %v1501
    %v1503 = vpop.f32.mrb[0].mxu0
    %v1504 = vadd.f32 %v640, %v1503
    %v1505 = vpop.f32.mrb[0].mxu0
    %v1506 = vadd.f32 %v642, %v1505
    %1507 = vdwg.mxu0
    %1508 = vmatprep.subr.bf16.mxu0 %v1156
    %1509 = vmatpush1.bf16.msra.mxu0 %v1155
    %1510 = vmatprep.subr.bf16.mxu0 %v1172
    %1511 = vmatpush1.bf16.msra.mxu0 %v1171
    %1512 = vmatprep.subr.bf16.mxu0 %v1263
    %1513 = vmatpush1.bf16.msra.mxu0 %v1260
    %1514 = vmatprep.subr.bf16.mxu0 0
    %1515 = vmatpush1.bf16.msra.mxu0 0
    %1516 = vmatprep.subr.bf16.mxu0 0
    %1517 = vmatpush1.bf16.msra.mxu0 0
    %1518 = vmatprep.subr.bf16.mxu0 0
    %1519 = vmatpush1.bf16.msra.mxu0 0
    %1520 = vmatprep.subr.bf16.mxu0 0
    %1521 = vmatpush1.bf16.msra.mxu0 0
    %1522 = vmatprep.subr.bf16.mxu0 0
    %1523 = vmatpush1.bf16.msra.mxu0 0
    %1524 = vmatprep.subr.bf16.mxu0 0
    %1525 = vmatpush1.bf16.msra.mxu0 0
    %1526 = vmatprep.subr.bf16.mxu0 0
    %1527 = vmatpush1.bf16.msra.mxu0 0
    %1528 = vmatprep.subr.bf16.mxu0 0
    %1529 = vmatpush1.bf16.msra.mxu0 0
    %1530 = vmatprep.subr.bf16.mxu0 0
    %1531 = vmatpush1.bf16.msra.mxu0 0
    %1532 = vmatprep.subr.bf16.mxu0 0
    %1533 = vmatpush1.bf16.msra.mxu0 0
    %1534 = vmatprep.subr.bf16.mxu0 0
    %1535 = vmatpush1.bf16.msra.mxu0 0
    %1536 = vmatprep.subr.bf16.mxu0 0
    %1537 = vmatpush1.bf16.msra.mxu0 0
    %1538 = vmatprep.subr.bf16.mxu0 0
    %1539 = vmatpush1.bf16.msra.mxu0 0
    %1540 = vmatprep.mubr.bf16.mxu0 0
    %1541 = vmatmul.mubr.bf16.gmra.mrb[0].mxu0 %v1230
    %v1542 = vpop.f32.mrb[0].mxu0
    %v1543 = vadd.f32 %v679, %v1542
    %v1544 = vpop.f32.mrb[0].mxu0
    %v1545 = vadd.f32 %v681, %v1544
    %v1546 = vpop.f32.mrb[0].mxu0
    %v1547 = vadd.f32 %v683, %v1546
    %v1548 = vpop.f32.mrb[0].mxu0
    %v1549 = vadd.f32 %v685, %v1548
    %1550 = vmatprep.mubr.bf16.mxu0 0
    %1551 = vmatmul.mubr.bf16.gmra.mrb[0].mxu0 %v1233
    %v1552 = vpop.f32.mrb[0].mxu0
    %v1553 = vadd.f32 %v689, %v1552
    %v1554 = vpop.f32.mrb[0].mxu0
    %v1555 = vadd.f32 %v691, %v1554
    %v1556 = vpop.f32.mrb[0].mxu0
    %v1557 = vadd.f32 %v693, %v1556
    %v1558 = vpop.f32.mrb[0].mxu0
    %v1559 = vadd.f32 %v695, %v1558
    %1560 = vmatprep.mubr.bf16.mxu0 0
    %1561 = vmatmul.mubr.bf16.gmra.mrb[0].mxu0 %v1236
    %v1562 = vpop.f32.mrb[0].mxu0
    %v1563 = vadd.f32 %v699, %v1562
    %v1564 = vpop.f32.mrb[0].mxu0
    %v1565 = vadd.f32 %v701, %v1564
    %v1566 = vpop.f32.mrb[0].mxu0
    %v1567 = vadd.f32 %v703, %v1566
    %v1568 = vpop.f32.mrb[0].mxu0
    %v1569 = vadd.f32 %v705, %v1568
    %1570 = vmatprep.mubr.bf16.mxu0 0
    %1571 = vmatmul.mubr.bf16.gmra.mrb[0].mxu0 %v1239
    %v1572 = vpop.f32.mrb[0].mxu0
    %v1573 = vadd.f32 %v709, %v1572
    %v1574 = vpop.f32.mrb[0].mxu0
    %v1575 = vadd.f32 %v711, %v1574
    %v1576 = vpop.f32.mrb[0].mxu0
    %v1577 = vadd.f32 %v713, %v1576
    %v1578 = vpop.f32.mrb[0].mxu0
    %v1579 = vadd.f32 %v715, %v1578
    %1580 = vdwg.mxu0
    %1581 = vmatprep.subr.bf16.mxu0 %v1158
    %1582 = vmatpush1.bf16.msra.mxu0 %v1157
    %1583 = vmatprep.subr.bf16.mxu0 %v1174
    %1584 = vmatpush1.bf16.msra.mxu0 %v1173
    %1585 = vmatprep.subr.bf16.mxu0 %v1269
    %1586 = vmatpush1.bf16.msra.mxu0 %v1266
    %1587 = vmatprep.subr.bf16.mxu0 0
    %1588 = vmatpush1.bf16.msra.mxu0 0
    %1589 = vmatprep.subr.bf16.mxu0 0
    %1590 = vmatpush1.bf16.msra.mxu0 0
    %1591 = vmatprep.subr.bf16.mxu0 0
    %1592 = vmatpush1.bf16.msra.mxu0 0
    %1593 = vmatprep.subr.bf16.mxu0 0
    %1594 = vmatpush1.bf16.msra.mxu0 0
    %1595 = vmatprep.subr.bf16.mxu0 0
    %1596 = vmatpush1.bf16.msra.mxu0 0
    %1597 = vmatprep.subr.bf16.mxu0 0
    %1598 = vmatpush1.bf16.msra.mxu0 0
    %1599 = vmatprep.subr.bf16.mxu0 0
    %1600 = vmatpush1.bf16.msra.mxu0 0
    %1601 = vmatprep.subr.bf16.mxu0 0
    %1602 = vmatpush1.bf16.msra.mxu0 0
    %1603 = vmatprep.subr.bf16.mxu0 0
    %1604 = vmatpush1.bf16.msra.mxu0 0
    %1605 = vmatprep.subr.bf16.mxu0 0
    %1606 = vmatpush1.bf16.msra.mxu0 0
    %1607 = vmatprep.subr.bf16.mxu0 0
    %1608 = vmatpush1.bf16.msra.mxu0 0
    %1609 = vmatprep.subr.bf16.mxu0 0
    %1610 = vmatpush1.bf16.msra.mxu0 0
    %1611 = vmatprep.subr.bf16.mxu0 0
    %1612 = vmatpush1.bf16.msra.mxu0 0
    %1613 = vmatprep.mubr.bf16.mxu0 0
    %1614 = vmatmul.mubr.bf16.gmra.mrb[0].mxu0 %v1230
    %v1615 = vpop.f32.mrb[0].mxu0
    %v1616 = vadd.f32 %v752, %v1615
    %v1617 = vpop.f32.mrb[0].mxu0
    %v1618 = vadd.f32 %v754, %v1617
    %v1619 = vpop.f32.mrb[0].mxu0
    %v1620 = vadd.f32 %v756, %v1619
    %v1621 = vpop.f32.mrb[0].mxu0
    %v1622 = vadd.f32 %v758, %v1621
    %1623 = vmatprep.mubr.bf16.mxu0 0
    %1624 = vmatmul.mubr.bf16.gmra.mrb[0].mxu0 %v1233
    %v1625 = vpop.f32.mrb[0].mxu0
    %v1626 = vadd.f32 %v762, %v1625
    %v1627 = vpop.f32.mrb[0].mxu0
    %v1628 = vadd.f32 %v764, %v1627
    %v1629 = vpop.f32.mrb[0].mxu0
    %v1630 = vadd.f32 %v766, %v1629
    %v1631 = vpop.f32.mrb[0].mxu0
    %v1632 = vadd.f32 %v768, %v1631
    %1633 = vmatprep.mubr.bf16.mxu0 0
    %1634 = vmatmul.mubr.bf16.gmra.mrb[0].mxu0 %v1236
    %v1635 = vpop.f32.mrb[0].mxu0
    %v1636 = vadd.f32 %v772, %v1635
    %v1637 = vpop.f32.mrb[0].mxu0
    %v1638 = vadd.f32 %v774, %v1637
    %v1639 = vpop.f32.mrb[0].mxu0
    %v1640 = vadd.f32 %v776, %v1639
    %v1641 = vpop.f32.mrb[0].mxu0
    %v1642 = vadd.f32 %v778, %v1641
    %1643 = vmatprep.mubr.bf16.mxu0 0
    %1644 = vmatmul.mubr.bf16.gmra.mrb[0].mxu0 %v1239
    %v1645 = vpop.f32.mrb[0].mxu0
    %v1646 = vadd.f32 %v782, %v1645
    %v1647 = vpop.f32.mrb[0].mxu0
    %v1648 = vadd.f32 %v784, %v1647
    %v1649 = vpop.f32.mrb[0].mxu0
    %v1650 = vadd.f32 %v786, %v1649
    %v1651 = vpop.f32.mrb[0].mxu0
    %v1652 = vadd.f32 %v788, %v1651
    %1653 = vdwg.mxu0
    %1654 = vmatprep.subr.bf16.mxu0 %v1160
    %1655 = vmatpush1.bf16.msra.mxu0 %v1159
    %1656 = vmatprep.subr.bf16.mxu0 %v1176
    %1657 = vmatpush1.bf16.msra.mxu0 %v1175
    %1658 = vmatprep.subr.bf16.mxu0 %v1275
    %1659 = vmatpush1.bf16.msra.mxu0 %v1272
    %1660 = vmatprep.subr.bf16.mxu0 0
    %1661 = vmatpush1.bf16.msra.mxu0 0
    %1662 = vmatprep.subr.bf16.mxu0 0
    %1663 = vmatpush1.bf16.msra.mxu0 0
    %1664 = vmatprep.subr.bf16.mxu0 0
    %1665 = vmatpush1.bf16.msra.mxu0 0
    %1666 = vmatprep.subr.bf16.mxu0 0
    %1667 = vmatpush1.bf16.msra.mxu0 0
    %1668 = vmatprep.subr.bf16.mxu0 0
    %1669 = vmatpush1.bf16.msra.mxu0 0
    %1670 = vmatprep.subr.bf16.mxu0 0
    %1671 = vmatpush1.bf16.msra.mxu0 0
    %1672 = vmatprep.subr.bf16.mxu0 0
    %1673 = vmatpush1.bf16.msra.mxu0 0
    %1674 = vmatprep.subr.bf16.mxu0 0
    %1675 = vmatpush1.bf16.msra.mxu0 0
    %1676 = vmatprep.subr.bf16.mxu0 0
    %1677 = vmatpush1.bf16.msra.mxu0 0
    %1678 = vmatprep.subr.bf16.mxu0 0
    %1679 = vmatpush1.bf16.msra.mxu0 0
    %1680 = vmatprep.subr.bf16.mxu0 0
    %1681 = vmatpush1.bf16.msra.mxu0 0
    %1682 = vmatprep.subr.bf16.mxu0 0
    %1683 = vmatpush1.bf16.msra.mxu0 0
    %1684 = vmatprep.subr.bf16.mxu0 0
    %1685 = vmatpush1.bf16.msra.mxu0 0
    %1686 = vmatprep.mubr.bf16.mxu0 0
    %1687 = vmatmul.mubr.bf16.gmra.mrb[0].mxu0 %v1230
    %v1688 = vpop.f32.mrb[0].mxu0
    %v1689 = vadd.f32 %v825, %v1688
    %v1690 = vpop.f32.mrb[0].mxu0
    %v1691 = vadd.f32 %v827, %v1690
    %v1692 = vpop.f32.mrb[0].mxu0
    %v1693 = vadd.f32 %v829, %v1692
    %v1694 = vpop.f32.mrb[0].mxu0
    %v1695 = vadd.f32 %v831, %v1694
    %1696 = vmatprep.mubr.bf16.mxu0 0
    %1697 = vmatmul.mubr.bf16.gmra.mrb[0].mxu0 %v1233
    %v1698 = vpop.f32.mrb[0].mxu0
    %v1699 = vadd.f32 %v835, %v1698
    %v1700 = vpop.f32.mrb[0].mxu0
    %v1701 = vadd.f32 %v837, %v1700
    %v1702 = vpop.f32.mrb[0].mxu0
    %v1703 = vadd.f32 %v839, %v1702
    %v1704 = vpop.f32.mrb[0].mxu0
    %v1705 = vadd.f32 %v841, %v1704
    %1706 = vmatprep.mubr.bf16.mxu0 0
    %1707 = vmatmul.mubr.bf16.gmra.mrb[0].mxu0 %v1236
    %v1708 = vpop.f32.mrb[0].mxu0
    %v1709 = vadd.f32 %v845, %v1708
    %v1710 = vpop.f32.mrb[0].mxu0
    %v1711 = vadd.f32 %v847, %v1710
    %v1712 = vpop.f32.mrb[0].mxu0
    %v1713 = vadd.f32 %v849, %v1712
    %v1714 = vpop.f32.mrb[0].mxu0
    %v1715 = vadd.f32 %v851, %v1714
    %1716 = vmatprep.mubr.bf16.mxu0 0
    %1717 = vmatmul.mubr.bf16.gmra.mrb[0].mxu0 %v1239
    %v1718 = vpop.f32.mrb[0].mxu0
    %v1719 = vadd.f32 %v855, %v1718
    %v1720 = vpop.f32.mrb[0].mxu0
    %v1721 = vadd.f32 %v857, %v1720
    %v1722 = vpop.f32.mrb[0].mxu0
    %v1723 = vadd.f32 %v859, %v1722
    %v1724 = vpop.f32.mrb[0].mxu0
    %v1725 = vadd.f32 %v861, %v1724
    %1726 = vdwg.mxu0
    %1727 = vmatprep.subr.bf16.mxu0 %v1162
    %1728 = vmatpush1.bf16.msra.mxu0 %v1161
    %1729 = vmatprep.subr.bf16.mxu0 %v1178
    %1730 = vmatpush1.bf16.msra.mxu0 %v1177
    %1731 = vmatprep.subr.bf16.mxu0 %v1281
    %1732 = vmatpush1.bf16.msra.mxu0 %v1278
    %1733 = vmatprep.subr.bf16.mxu0 0
    %1734 = vmatpush1.bf16.msra.mxu0 0
    %1735 = vmatprep.subr.bf16.mxu0 0
    %1736 = vmatpush1.bf16.msra.mxu0 0
    %1737 = vmatprep.subr.bf16.mxu0 0
    %1738 = vmatpush1.bf16.msra.mxu0 0
    %1739 = vmatprep.subr.bf16.mxu0 0
    %1740 = vmatpush1.bf16.msra.mxu0 0
    %1741 = vmatprep.subr.bf16.mxu0 0
    %1742 = vmatpush1.bf16.msra.mxu0 0
    %1743 = vmatprep.subr.bf16.mxu0 0
    %1744 = vmatpush1.bf16.msra.mxu0 0
    %1745 = vmatprep.subr.bf16.mxu0 0
    %1746 = vmatpush1.bf16.msra.mxu0 0
    %1747 = vmatprep.subr.bf16.mxu0 0
    %1748 = vmatpush1.bf16.msra.mxu0 0
    %1749 = vmatprep.subr.bf16.mxu0 0
    %1750 = vmatpush1.bf16.msra.mxu0 0
    %1751 = vmatprep.subr.bf16.mxu0 0
    %1752 = vmatpush1.bf16.msra.mxu0 0
    %1753 = vmatprep.subr.bf16.mxu0 0
    %1754 = vmatpush1.bf16.msra.mxu0 0
    %1755 = vmatprep.subr.bf16.mxu0 0
    %1756 = vmatpush1.bf16.msra.mxu0 0
    %1757 = vmatprep.subr.bf16.mxu0 0
    %1758 = vmatpush1.bf16.msra.mxu0 0
    %1759 = vmatprep.mubr.bf16.mxu0 0
    %1760 = vmatmul.mubr.bf16.gmra.mrb[0].mxu0 %v1230
    %v1761 = vpop.f32.mrb[0].mxu0
    %v1762 = vadd.f32 %v898, %v1761
    %v1763 = vpop.f32.mrb[0].mxu0
    %v1764 = vadd.f32 %v900, %v1763
    %v1765 = vpop.f32.mrb[0].mxu0
    %v1766 = vadd.f32 %v902, %v1765
    %v1767 = vpop.f32.mrb[0].mxu0
    %v1768 = vadd.f32 %v904, %v1767
    %1769 = vmatprep.mubr.bf16.mxu0 0
    %1770 = vmatmul.mubr.bf16.gmra.mrb[0].mxu0 %v1233
    %v1771 = vpop.f32.mrb[0].mxu0
    %v1772 = vadd.f32 %v908, %v1771
    %v1773 = vpop.f32.mrb[0].mxu0
    %v1774 = vadd.f32 %v910, %v1773
    %v1775 = vpop.f32.mrb[0].mxu0
    %v1776 = vadd.f32 %v912, %v1775
    %v1777 = vpop.f32.mrb[0].mxu0
    %v1778 = vadd.f32 %v914, %v1777
    %1779 = vmatprep.mubr.bf16.mxu0 0
    %1780 = vmatmul.mubr.bf16.gmra.mrb[0].mxu0 %v1236
    %v1781 = vpop.f32.mrb[0].mxu0
    %v1782 = vadd.f32 %v918, %v1781
    %v1783 = vpop.f32.mrb[0].mxu0
    %v1784 = vadd.f32 %v920, %v1783
    %v1785 = vpop.f32.mrb[0].mxu0
    %v1786 = vadd.f32 %v922, %v1785
    %v1787 = vpop.f32.mrb[0].mxu0
    %v1788 = vadd.f32 %v924, %v1787
    %1789 = vmatprep.mubr.bf16.mxu0 0
    %1790 = vmatmul.mubr.bf16.gmra.mrb[0].mxu0 %v1239
    %v1791 = vpop.f32.mrb[0].mxu0
    %v1792 = vadd.f32 %v928, %v1791
    %v1793 = vpop.f32.mrb[0].mxu0
    %v1794 = vadd.f32 %v930, %v1793
    %v1795 = vpop.f32.mrb[0].mxu0
    %v1796 = vadd.f32 %v932, %v1795
    %v1797 = vpop.f32.mrb[0].mxu0
    %v1798 = vadd.f32 %v934, %v1797
    %1799 = vdwg.mxu0
    %1800 = vmatprep.subr.bf16.mxu0 %v1164
    %1801 = vmatpush1.bf16.msra.mxu0 %v1163
    %1802 = vmatprep.subr.bf16.mxu0 %v1180
    %1803 = vmatpush1.bf16.msra.mxu0 %v1179
    %1804 = vmatprep.subr.bf16.mxu0 %v1287
    %1805 = vmatpush1.bf16.msra.mxu0 %v1284
    %1806 = vmatprep.subr.bf16.mxu0 0
    %1807 = vmatpush1.bf16.msra.mxu0 0
    %1808 = vmatprep.subr.bf16.mxu0 0
    %1809 = vmatpush1.bf16.msra.mxu0 0
    %1810 = vmatprep.subr.bf16.mxu0 0
    %1811 = vmatpush1.bf16.msra.mxu0 0
    %1812 = vmatprep.subr.bf16.mxu0 0
    %1813 = vmatpush1.bf16.msra.mxu0 0
    %1814 = vmatprep.subr.bf16.mxu0 0
    %1815 = vmatpush1.bf16.msra.mxu0 0
    %1816 = vmatprep.subr.bf16.mxu0 0
    %1817 = vmatpush1.bf16.msra.mxu0 0
    %1818 = vmatprep.subr.bf16.mxu0 0
    %1819 = vmatpush1.bf16.msra.mxu0 0
    %1820 = vmatprep.subr.bf16.mxu0 0
    %1821 = vmatpush1.bf16.msra.mxu0 0
    %1822 = vmatprep.subr.bf16.mxu0 0
    %1823 = vmatpush1.bf16.msra.mxu0 0
    %1824 = vmatprep.subr.bf16.mxu0 0
    %1825 = vmatpush1.bf16.msra.mxu0 0
    %1826 = vmatprep.subr.bf16.mxu0 0
    %1827 = vmatpush1.bf16.msra.mxu0 0
    %1828 = vmatprep.subr.bf16.mxu0 0
    %1829 = vmatpush1.bf16.msra.mxu0 0
    %1830 = vmatprep.subr.bf16.mxu0 0
    %1831 = vmatpush1.bf16.msra.mxu0 0
    %1832 = vmatprep.mubr.bf16.mxu0 0
    %1833 = vmatmul.mubr.bf16.gmra.mrb[0].mxu0 %v1230
    %v1834 = vpop.f32.mrb[0].mxu0
    %v1835 = vadd.f32 %v971, %v1834
    %v1836 = vpop.f32.mrb[0].mxu0
    %v1837 = vadd.f32 %v973, %v1836
    %v1838 = vpop.f32.mrb[0].mxu0
    %v1839 = vadd.f32 %v975, %v1838
    %v1840 = vpop.f32.mrb[0].mxu0
    %v1841 = vadd.f32 %v977, %v1840
    %1842 = vmatprep.mubr.bf16.mxu0 0
    %1843 = vmatmul.mubr.bf16.gmra.mrb[0].mxu0 %v1233
    %v1844 = vpop.f32.mrb[0].mxu0
    %v1845 = vadd.f32 %v981, %v1844
    %v1846 = vpop.f32.mrb[0].mxu0
    %v1847 = vadd.f32 %v983, %v1846
    %v1848 = vpop.f32.mrb[0].mxu0
    %v1849 = vadd.f32 %v985, %v1848
    %v1850 = vpop.f32.mrb[0].mxu0
    %v1851 = vadd.f32 %v987, %v1850
    %1852 = vmatprep.mubr.bf16.mxu0 0
    %1853 = vmatmul.mubr.bf16.gmra.mrb[0].mxu0 %v1236
    %v1854 = vpop.f32.mrb[0].mxu0
    %v1855 = vadd.f32 %v991, %v1854
    %v1856 = vpop.f32.mrb[0].mxu0
    %v1857 = vadd.f32 %v993, %v1856
    %v1858 = vpop.f32.mrb[0].mxu0
    %v1859 = vadd.f32 %v995, %v1858
    %v1860 = vpop.f32.mrb[0].mxu0
    %v1861 = vadd.f32 %v997, %v1860
    %1862 = vmatprep.mubr.bf16.mxu0 0
    %1863 = vmatmul.mubr.bf16.gmra.mrb[0].mxu0 %v1239
    %v1864 = vpop.f32.mrb[0].mxu0
    %v1865 = vadd.f32 %v1001, %v1864
    %v1866 = vpop.f32.mrb[0].mxu0
    %v1867 = vadd.f32 %v1003, %v1866
    %v1868 = vpop.f32.mrb[0].mxu0
    %v1869 = vadd.f32 %v1005, %v1868
    %v1870 = vpop.f32.mrb[0].mxu0
    %v1871 = vadd.f32 %v1007, %v1870
    %1872 = vdwg.mxu0
    %v1873 = vpack.c.bf16 %v1328, %v1324
    %v1874 = vpack.c.bf16 %v1330, %v1326
    %v1875 = vpack.c.bf16 %v1401, %v1397
    %v1876 = vpack.c.bf16 %v1403, %v1399
    %v1877 = vpack.c.bf16 %v1474, %v1470
    %v1878 = vpack.c.bf16 %v1476, %v1472
    %v1879 = vpack.c.bf16 %v1547, %v1543
    %v1880 = vpack.c.bf16 %v1549, %v1545
    %v1881 = vpack.c.bf16 %v1620, %v1616
    %v1882 = vpack.c.bf16 %v1622, %v1618
    %v1883 = vpack.c.bf16 %v1693, %v1689
    %v1884 = vpack.c.bf16 %v1695, %v1691
    %v1885 = vpack.c.bf16 %v1766, %v1762
    %v1886 = vpack.c.bf16 %v1768, %v1764
    %v1887 = vpack.c.bf16 %v1839, %v1835
    %v1888 = vpack.c.bf16 %v1841, %v1837
    %v1889 = vpack.c.bf16 %v1338, %v1334
    %v1890 = vpack.c.bf16 %v1340, %v1336
    %v1891 = vpack.c.bf16 %v1411, %v1407
    %v1892 = vpack.c.bf16 %v1413, %v1409
    %v1893 = vpack.c.bf16 %v1484, %v1480
    %v1894 = vpack.c.bf16 %v1486, %v1482
    %v1895 = vpack.c.bf16 %v1557, %v1553
    %v1896 = vpack.c.bf16 %v1559, %v1555
    %v1897 = vpack.c.bf16 %v1630, %v1626
    %v1898 = vpack.c.bf16 %v1632, %v1628
    %v1899 = vpack.c.bf16 %v1703, %v1699
    %v1900 = vpack.c.bf16 %v1705, %v1701
    %v1901 = vpack.c.bf16 %v1776, %v1772
    %v1902 = vpack.c.bf16 %v1778, %v1774
    %v1903 = vpack.c.bf16 %v1849, %v1845
    %v1904 = vpack.c.bf16 %v1851, %v1847
    %v1905 = vpack.c.bf16 %v1348, %v1344
    %v1906 = vpack.c.bf16 %v1350, %v1346
    %v1907 = vpack.c.bf16 %v1421, %v1417
    %v1908 = vpack.c.bf16 %v1423, %v1419
    %v1909 = vpack.c.bf16 %v1494, %v1490
    %v1910 = vpack.c.bf16 %v1496, %v1492
    %v1911 = vpack.c.bf16 %v1567, %v1563
    %v1912 = vpack.c.bf16 %v1569, %v1565
    %v1913 = vpack.c.bf16 %v1640, %v1636
    %v1914 = vpack.c.bf16 %v1642, %v1638
    %v1915 = vpack.c.bf16 %v1713, %v1709
    %v1916 = vpack.c.bf16 %v1715, %v1711
    %v1917 = vpack.c.bf16 %v1786, %v1782
    %v1918 = vpack.c.bf16 %v1788, %v1784
    %v1919 = vpack.c.bf16 %v1859, %v1855
    %v1920 = vpack.c.bf16 %v1861, %v1857
    %v1921 = vpack.c.bf16 %v1358, %v1354
    %v1922 = vpack.c.bf16 %v1360, %v1356
    %v1923 = vpack.c.bf16 %v1431, %v1427
    %v1924 = vpack.c.bf16 %v1433, %v1429
    %v1925 = vpack.c.bf16 %v1504, %v1500
    %v1926 = vpack.c.bf16 %v1506, %v1502
    %v1927 = vpack.c.bf16 %v1577, %v1573
    %v1928 = vpack.c.bf16 %v1579, %v1575
    %v1929 = vpack.c.bf16 %v1650, %v1646
    %v1930 = vpack.c.bf16 %v1652, %v1648
    %v1931 = vpack.c.bf16 %v1723, %v1719
    %v1932 = vpack.c.bf16 %v1725, %v1721
    %v1933 = vpack.c.bf16 %v1796, %v1792
    %v1934 = vpack.c.bf16 %v1798, %v1794
    %v1935 = vpack.c.bf16 %v1869, %v1865
    %v1936 = vpack.c.bf16 %v1871, %v1867
    %v2001 = vunpack.c.l.b16 %v1873
    %v2002 = vunpack.c.l.b16 %v1874
    %v2003 = vunpack.c.l.b16 %v1875
    %v2004 = vunpack.c.l.b16 %v1876
    %v2005 = vunpack.c.l.b16 %v1877
    %v2006 = vunpack.c.l.b16 %v1878
    %v2007 = vunpack.c.l.b16 %v1879
    %v2008 = vunpack.c.l.b16 %v1880
    %v2009 = vunpack.c.l.b16 %v1881
    %v2010 = vunpack.c.l.b16 %v1882
    %v2011 = vunpack.c.l.b16 %v1883
    %v2012 = vunpack.c.l.b16 %v1884
    %v2013 = vunpack.c.l.b16 %v1885
    %v2014 = vunpack.c.l.b16 %v1886
    %v2015 = vunpack.c.l.b16 %v1887
    %v2016 = vunpack.c.l.b16 %v1888
    %v2017 = vunpack.c.h.b16 %v1873
    %v2018 = vunpack.c.h.b16 %v1874
    %v2019 = vunpack.c.h.b16 %v1875
    %v2020 = vunpack.c.h.b16 %v1876
    %v2021 = vunpack.c.h.b16 %v1877
    %v2022 = vunpack.c.h.b16 %v1878
    %v2023 = vunpack.c.h.b16 %v1879
    %v2024 = vunpack.c.h.b16 %v1880
    %v2025 = vunpack.c.h.b16 %v1881
    %v2026 = vunpack.c.h.b16 %v1882
    %v2027 = vunpack.c.h.b16 %v1883
    %v2028 = vunpack.c.h.b16 %v1884
    %v2029 = vunpack.c.h.b16 %v1885
    %v2030 = vunpack.c.h.b16 %v1886
    %v2031 = vunpack.c.h.b16 %v1887
    %v2032 = vunpack.c.h.b16 %v1888
    %v2033 = vunpack.c.l.b16 %v1889
    %v2034 = vunpack.c.l.b16 %v1890
    %v2035 = vunpack.c.l.b16 %v1891
    %v2036 = vunpack.c.l.b16 %v1892
    %v2037 = vunpack.c.l.b16 %v1893
    %v2038 = vunpack.c.l.b16 %v1894
    %v2039 = vunpack.c.l.b16 %v1895
    %v2040 = vunpack.c.l.b16 %v1896
    %v2041 = vunpack.c.l.b16 %v1897
    %v2042 = vunpack.c.l.b16 %v1898
    %v2043 = vunpack.c.l.b16 %v1899
    %v2044 = vunpack.c.l.b16 %v1900
    %v2045 = vunpack.c.l.b16 %v1901
    %v2046 = vunpack.c.l.b16 %v1902
    %v2047 = vunpack.c.l.b16 %v1903
    %v2048 = vunpack.c.l.b16 %v1904
    %v2049 = vunpack.c.h.b16 %v1889
    %v2050 = vunpack.c.h.b16 %v1890
    %v2051 = vunpack.c.h.b16 %v1891
    %v2052 = vunpack.c.h.b16 %v1892
    %v2053 = vunpack.c.h.b16 %v1893
    %v2054 = vunpack.c.h.b16 %v1894
    %v2055 = vunpack.c.h.b16 %v1895
    %v2056 = vunpack.c.h.b16 %v1896
    %v2057 = vunpack.c.h.b16 %v1897
    %v2058 = vunpack.c.h.b16 %v1898
    %v2059 = vunpack.c.h.b16 %v1899
    %v2060 = vunpack.c.h.b16 %v1900
    %v2061 = vunpack.c.h.b16 %v1901
    %v2062 = vunpack.c.h.b16 %v1902
    %v2063 = vunpack.c.h.b16 %v1903
    %v2064 = vunpack.c.h.b16 %v1904
    %v2065 = vunpack.c.l.b16 %v1905
    %v2066 = vunpack.c.l.b16 %v1906
    %v2067 = vunpack.c.l.b16 %v1907
    %v2068 = vunpack.c.l.b16 %v1908
    %v2069 = vunpack.c.l.b16 %v1909
    %v2070 = vunpack.c.l.b16 %v1910
    %v2071 = vunpack.c.l.b16 %v1911
    %v2072 = vunpack.c.l.b16 %v1912
    %v2073 = vunpack.c.l.b16 %v1913
    %v2074 = vunpack.c.l.b16 %v1914
    %v2075 = vunpack.c.l.b16 %v1915
    %v2076 = vunpack.c.l.b16 %v1916
    %v2077 = vunpack.c.l.b16 %v1917
    %v2078 = vunpack.c.l.b16 %v1918
    %v2079 = vunpack.c.l.b16 %v1919
    %v2080 = vunpack.c.l.b16 %v1920
    %v2081 = vunpack.c.h.b16 %v1905
    %v2082 = vunpack.c.h.b16 %v1906
    %v2083 = vunpack.c.h.b16 %v1907
    %v2084 = vunpack.c.h.b16 %v1908
    %v2085 = vunpack.c.h.b16 %v1909
    %v2086 = vunpack.c.h.b16 %v1910
    %v2087 = vunpack.c.h.b16 %v1911
    %v2088 = vunpack.c.h.b16 %v1912
    %v2089 = vunpack.c.h.b16 %v1913
    %v2090 = vunpack.c.h.b16 %v1914
    %v2091 = vunpack.c.h.b16 %v1915
    %v2092 = vunpack.c.h.b16 %v1916
    %v2093 = vunpack.c.h.b16 %v1917
    %v2094 = vunpack.c.h.b16 %v1918
    %v2095 = vunpack.c.h.b16 %v1919
    %v2096 = vunpack.c.h.b16 %v1920
    %v2097 = vunpack.c.l.b16 %v1921
    %v2098 = vunpack.c.l.b16 %v1922
    %v2099 = vunpack.c.l.b16 %v1923
    %v2100 = vunpack.c.l.b16 %v1924
    %v2101 = vunpack.c.l.b16 %v1925
    %v2102 = vunpack.c.l.b16 %v1926
    %v2103 = vunpack.c.l.b16 %v1927
    %v2104 = vunpack.c.l.b16 %v1928
    %v2105 = vunpack.c.l.b16 %v1929
    %v2106 = vunpack.c.l.b16 %v1930
    %v2107 = vunpack.c.l.b16 %v1931
    %v2108 = vunpack.c.l.b16 %v1932
    %v2109 = vunpack.c.l.b16 %v1933
    %v2110 = vunpack.c.l.b16 %v1934
    %v2111 = vunpack.c.l.b16 %v1935
    %v2112 = vunpack.c.l.b16 %v1936
    %v2113 = vunpack.c.h.b16 %v1921
    %v2114 = vunpack.c.h.b16 %v1922
    %v2115 = vunpack.c.h.b16 %v1923
    %v2116 = vunpack.c.h.b16 %v1924
    %v2117 = vunpack.c.h.b16 %v1925
    %v2118 = vunpack.c.h.b16 %v1926
    %v2119 = vunpack.c.h.b16 %v1927
    %v2120 = vunpack.c.h.b16 %v1928
    %v2121 = vunpack.c.h.b16 %v1929
    %v2122 = vunpack.c.h.b16 %v1930
    %v2123 = vunpack.c.h.b16 %v1931
    %v2124 = vunpack.c.h.b16 %v1932
    %v2125 = vunpack.c.h.b16 %v1933
    %v2126 = vunpack.c.h.b16 %v1934
    %v2127 = vunpack.c.h.b16 %v1935
    %v2128 = vunpack.c.h.b16 %v1936
    %v2129 = vpack.c.b16 %v2002, %v2001
    %v2130 = vpack.c.b16 %v2004, %v2003
    %v2131 = vpack.c.b16 %v2006, %v2005
    %v2132 = vpack.c.b16 %v2008, %v2007
    %v2133 = vpack.c.b16 %v2010, %v2009
    %v2134 = vpack.c.b16 %v2012, %v2011
    %v2135 = vpack.c.b16 %v2014, %v2013
    %v2136 = vpack.c.b16 %v2016, %v2015
    %v2137 = vpack.c.b16 %v2018, %v2017
    %v2138 = vpack.c.b16 %v2020, %v2019
    %v2139 = vpack.c.b16 %v2022, %v2021
    %v2140 = vpack.c.b16 %v2024, %v2023
    %v2141 = vpack.c.b16 %v2026, %v2025
    %v2142 = vpack.c.b16 %v2028, %v2027
    %v2143 = vpack.c.b16 %v2030, %v2029
    %v2144 = vpack.c.b16 %v2032, %v2031
    %v2145 = vpack.c.b16 %v2034, %v2033
    %v2146 = vpack.c.b16 %v2036, %v2035
    %v2147 = vpack.c.b16 %v2038, %v2037
    %v2148 = vpack.c.b16 %v2040, %v2039
    %v2149 = vpack.c.b16 %v2042, %v2041
    %v2150 = vpack.c.b16 %v2044, %v2043
    %v2151 = vpack.c.b16 %v2046, %v2045
    %v2152 = vpack.c.b16 %v2048, %v2047
    %v2153 = vpack.c.b16 %v2050, %v2049
    %v2154 = vpack.c.b16 %v2052, %v2051
    %v2155 = vpack.c.b16 %v2054, %v2053
    %v2156 = vpack.c.b16 %v2056, %v2055
    %v2157 = vpack.c.b16 %v2058, %v2057
    %v2158 = vpack.c.b16 %v2060, %v2059
    %v2159 = vpack.c.b16 %v2062, %v2061
    %v2160 = vpack.c.b16 %v2064, %v2063
    %v2161 = vpack.c.b16 %v2066, %v2065
    %v2162 = vpack.c.b16 %v2068, %v2067
    %v2163 = vpack.c.b16 %v2070, %v2069
    %v2164 = vpack.c.b16 %v2072, %v2071
    %v2165 = vpack.c.b16 %v2074, %v2073
    %v2166 = vpack.c.b16 %v2076, %v2075
    %v2167 = vpack.c.b16 %v2078, %v2077
    %v2168 = vpack.c.b16 %v2080, %v2079
    %v2169 = vpack.c.b16 %v2082, %v2081
    %v2170 = vpack.c.b16 %v2084, %v2083
    %v2171 = vpack.c.b16 %v2086, %v2085
    %v2172 = vpack.c.b16 %v2088, %v2087
    %v2173 = vpack.c.b16 %v2090, %v2089
    %v2174 = vpack.c.b16 %v2092, %v2091
    %v2175 = vpack.c.b16 %v2094, %v2093
    %v2176 = vpack.c.b16 %v2096, %v2095
    %v2177 = vpack.c.b16 %v2098, %v2097
    %v2178 = vpack.c.b16 %v2100, %v2099
    %v2179 = vpack.c.b16 %v2102, %v2101
    %v2180 = vpack.c.b16 %v2104, %v2103
    %v2181 = vpack.c.b16 %v2106, %v2105
    %v2182 = vpack.c.b16 %v2108, %v2107
    %v2183 = vpack.c.b16 %v2110, %v2109
    %v2184 = vpack.c.b16 %v2112, %v2111
    %v2185 = vpack.c.b16 %v2114, %v2113
    %v2186 = vpack.c.b16 %v2116, %v2115
    %v2187 = vpack.c.b16 %v2118, %v2117
    %v2188 = vpack.c.b16 %v2120, %v2119
    %v2189 = vpack.c.b16 %v2122, %v2121
    %v2190 = vpack.c.b16 %v2124, %v2123
    %v2191 = vpack.c.b16 %v2126, %v2125
    %v2192 = vpack.c.b16 %v2128, %v2127
    %2257 = vst [vmem:[#allocation7] sm:$0xff] %v2129
    %2258 = vst [vmem:[#allocation7 + $0x8] sm:$0xff] %v2130
    %2259 = vst [vmem:[#allocation7 + $0x10] sm:$0xff] %v2131
    %2260 = vst [vmem:[#allocation7 + $0x18] sm:$0xff] %v2132
    %2261 = vst [vmem:[#allocation7 + $0x20] sm:$0xff] %v2133
    %2262 = vst [vmem:[#allocation7 + $0x28] sm:$0xff] %v2134
    %2263 = vst [vmem:[#allocation7 + $0x30] sm:$0xff] %v2135
    %2264 = vst [vmem:[#allocation7 + $0x38] sm:$0xff] %v2136
    %2265 = vst [vmem:[#allocation7 + $0x40] sm:$0xff] %v2137
    %2266 = vst [vmem:[#allocation7 + $0x48] sm:$0xff] %v2138
    %2267 = vst [vmem:[#allocation7 + $0x50] sm:$0xff] %v2139
    %2268 = vst [vmem:[#allocation7 + $0x58] sm:$0xff] %v2140
    %2269 = vst [vmem:[#allocation7 + $0x60] sm:$0xff] %v2141
    %2270 = vst [vmem:[#allocation7 + $0x68] sm:$0xff] %v2142
    %2271 = vst [vmem:[#allocation7 + $0x70] sm:$0xff] %v2143
    %2272 = vst [vmem:[#allocation7 + $0x78] sm:$0xff] %v2144
    %2273 = vst [vmem:[#allocation7 + $0x80] sm:$0xff] %v2145
    %2274 = vst [vmem:[#allocation7 + $0x88] sm:$0xff] %v2146
    %2275 = vst [vmem:[#allocation7 + $0x90] sm:$0xff] %v2147
    %2276 = vst [vmem:[#allocation7 + $0x98] sm:$0xff] %v2148
    %2277 = vst [vmem:[#allocation7 + $0xa0] sm:$0xff] %v2149
    %2278 = vst [vmem:[#allocation7 + $0xa8] sm:$0xff] %v2150
    %2279 = vst [vmem:[#allocation7 + $0xb0] sm:$0xff] %v2151
    %2280 = vst [vmem:[#allocation7 + $0xb8] sm:$0xff] %v2152
    %2281 = vst [vmem:[#allocation7 + $0xc0] sm:$0xff] %v2153
    %2282 = vst [vmem:[#allocation7 + $0xc8] sm:$0xff] %v2154
    %2283 = vst [vmem:[#allocation7 + $0xd0] sm:$0xff] %v2155
    %2284 = vst [vmem:[#allocation7 + $0xd8] sm:$0xff] %v2156
    %2285 = vst [vmem:[#allocation7 + $0xe0] sm:$0xff] %v2157
    %2286 = vst [vmem:[#allocation7 + $0xe8] sm:$0xff] %v2158
    %2287 = vst [vmem:[#allocation7 + $0xf0] sm:$0xff] %v2159
    %2288 = vst [vmem:[#allocation7 + $0xf8] sm:$0xff] %v2160
    %2289 = vst [vmem:[#allocation7 + $0x100] sm:$0xff] %v2161
    %2290 = vst [vmem:[#allocation7 + $0x108] sm:$0xff] %v2162
    %2291 = vst [vmem:[#allocation7 + $0x110] sm:$0xff] %v2163
    %2292 = vst [vmem:[#allocation7 + $0x118] sm:$0xff] %v2164
    %2293 = vst [vmem:[#allocation7 + $0x120] sm:$0xff] %v2165
    %2294 = vst [vmem:[#allocation7 + $0x128] sm:$0xff] %v2166
    %2295 = vst [vmem:[#allocation7 + $0x130] sm:$0xff] %v2167
    %2296 = vst [vmem:[#allocation7 + $0x138] sm:$0xff] %v2168
    %2297 = vst [vmem:[#allocation7 + $0x140] sm:$0xff] %v2169
    %2298 = vst [vmem:[#allocation7 + $0x148] sm:$0xff] %v2170
    %2299 = vst [vmem:[#allocation7 + $0x150] sm:$0xff] %v2171
    %2300 = vst [vmem:[#allocation7 + $0x158] sm:$0xff] %v2172
    %2301 = vst [vmem:[#allocation7 + $0x160] sm:$0xff] %v2173
    %2302 = vst [vmem:[#allocation7 + $0x168] sm:$0xff] %v2174
    %2303 = vst [vmem:[#allocation7 + $0x170] sm:$0xff] %v2175
    %2304 = vst [vmem:[#allocation7 + $0x178] sm:$0xff] %v2176
    %2305 = vst [vmem:[#allocation7 + $0x180] sm:$0xff] %v2177
    %2306 = vst [vmem:[#allocation7 + $0x188] sm:$0xff] %v2178
    %2307 = vst [vmem:[#allocation7 + $0x190] sm:$0xff] %v2179
    %2308 = vst [vmem:[#allocation7 + $0x198] sm:$0xff] %v2180
    %2309 = vst [vmem:[#allocation7 + $0x1a0] sm:$0xff] %v2181
    %2310 = vst [vmem:[#allocation7 + $0x1a8] sm:$0xff] %v2182
    %2311 = vst [vmem:[#allocation7 + $0x1b0] sm:$0xff] %v2183
    %2312 = vst [vmem:[#allocation7 + $0x1b8] sm:$0xff] %v2184
    %2313 = vst [vmem:[#allocation7 + $0x1c0] sm:$0xff] %v2185
    %2314 = vst [vmem:[#allocation7 + $0x1c8] sm:$0xff] %v2186
    %2315 = vst [vmem:[#allocation7 + $0x1d0] sm:$0xff] %v2187
    %2316 = vst [vmem:[#allocation7 + $0x1d8] sm:$0xff] %v2188
    %2317 = vst [vmem:[#allocation7 + $0x1e0] sm:$0xff] %v2189
    %2318 = vst [vmem:[#allocation7 + $0x1e8] sm:$0xff] %v2190
    %2319 = vst [vmem:[#allocation7 + $0x1f0] sm:$0xff] %v2191
    %2320 = vst [vmem:[#allocation7 + $0x1f8] sm:$0xff] %v2192
    // Predicated region
    $region26: #{tpu_custom_call.1} parent=1 // pred_check
      _
    $region27: #{tpu_custom_call.1} parent=1 // pred_check_branch
      %2322 = sbr.rel (0) target = $region29
    $region28: #{tpu_custom_call.1} parent=1 // pred_region
      %s2324 = ssub.s32 8192, 8192
      %2325 = vsyncadd [#allocation4], %s2324
      %s2326 = sshll.u32 [#allocation7], 4
      %s2327 = int_to_ptr.vmem [resolvable:$true] %s2326
      %2332 = dma.vmem_to_hbm [thread:$0]  %s2327, 8192, %s4, [#allocation4], 1024, 1024, 64
    $region29: #{tpu_custom_call.1} parent=1 // pred_fallthru
      _
    // Predicated region
    $region30: #{tpu_custom_call.1} parent=1 // pred_check
      _
    $region31: #{tpu_custom_call.1} parent=1 // pred_check_branch
      %2334 = sbr.rel (0) target = $region33
    $region32: #{tpu_custom_call.1} parent=1 // pred_region
      %2335 = dma.done [#allocation4], 8192
    $region33: #{tpu_custom_call.1} parent=1 // pred_fallthru
      _
    %2336 = vsyncpa [#allocation3], 1
    %2337 = vsyncpa [#allocation6], 1
    %2338 = vsyncpa [#allocation4], 1

</llo_original>
